<compile_context>
chip_gen: v7x
topology: tpu7x:2x2x1
jax: 0.10.0
libtpu: 0.0.40
codegen_flags: <defaults>
</compile_context>

<pallas_src>
import functools

import jax
import jax.numpy as jnp
import numpy as np
from jax import lax
from jax.experimental import pallas as pl
from jax.experimental.pallas import tpu as pltpu

RELU6_MAX = 6.0
BN_EPS = 1e-5
LANES = 128


def _round_up(x, m):
    return (x + m - 1) // m * m


def _inverted_residual_kernel(*refs, expand, use_shortcut):
    """One grid step = `tile_h` output rows of one batch image (NHWC, padded C).

    refs (expand=True):
      x_top (1, W, Cp)   halo row above the tile (clamped at the border)
      x_mid (TH, W, Cp)  the tile's own rows
      x_bot (1, W, Cp)   halo row below the tile (clamped at the border)
      w1 (Cp, Hp), s1/b1 (1, Hp)        1x1 expand conv + folded BN1
      wdw (3, 3, Hp), s2/b2 (1, Hp)     3x3 depthwise conv + folded BN2
      w3 (Hp, Op), s3/b3 (1, Op)        1x1 project conv + folded BN3
      o (TH, W, Op)
    When expand=False the w1/s1/b1 operands are omitted entirely.
    """
    if expand:
        (xt_ref, xm_ref, xb_ref, w1_ref, s1_ref, b1_ref,
         wdw_ref, s2_ref, b2_ref, w3_ref, s3_ref, b3_ref, o_ref) = refs
    else:
        (xt_ref, xm_ref, xb_ref,
         wdw_ref, s2_ref, b2_ref, w3_ref, s3_ref, b3_ref, o_ref) = refs

    th, W, cinp = xm_ref.shape
    hidp = wdw_ref.shape[2]
    coutp = o_ref.shape[2]
    R = th + 2

    t = pl.program_id(1)
    is_top_tile = t == 0
    is_bot_tile = t == pl.num_programs(1) - 1

    x_mid = xm_ref[...]                                        # (TH, W, Cp)
    xin = jnp.concatenate([xt_ref[...], x_mid, xb_ref[...]], axis=0)  # (R, W, Cp)

    # ---- 1x1 expand conv + BN + ReLU6 : (R*W, Cp) @ (Cp, Hp) on the MXU ----
    xin2d = xin.reshape(R * W, cinp)
    if expand:
        h2d = jnp.dot(xin2d, w1_ref[...], preferred_element_type=jnp.float32)
        h2d = jnp.clip(h2d * s1_ref[...] + b1_ref[...], 0.0, RELU6_MAX)
    else:
        h2d = xin2d.astype(jnp.float32)          # hidp == cinp in this case
    h3 = h2d.reshape(R, W, hidp)

    # The depthwise conv's zero padding lives in hidden-activation space, so at
    # the image border the halo rows of h (not of x!) must be zeroed.
    zrow = jnp.zeros((1, W, hidp), jnp.float32)
    h_top = jnp.where(is_top_tile, zrow, h3[0:1])
    h_bot = jnp.where(is_bot_tile, zrow, h3[R - 1:R])
    h = jnp.concatenate([h_top, h3[1:R - 1], h_bot], axis=0)   # (R, W, Hp)

    # ---- 3x3 depthwise conv (stride 1, pad 1) + BN + ReLU6 ----
    # W-direction taps: two zero-filled shifted copies, kept as values (no
    # padded VMEM scratch round-trip).  H-direction taps: leading-dim slices.
    zcol = jnp.zeros((R, 1, hidp), jnp.float32)
    h_l = jnp.concatenate([zcol, h[:, :W - 1, :]], axis=1)     # col j holds h[:, j-1]
    h_r = jnp.concatenate([h[:, 1:, :], zcol], axis=1)         # col j holds h[:, j+1]
    taps_w = (h_l, h, h_r)

    wdw = wdw_ref[...]                                         # (3, 3, Hp)
    acc = jnp.zeros((th, W, hidp), jnp.float32)
    for kh in range(3):
        for kw in range(3):
            wk = wdw[kh:kh + 1, kw:kw + 1, :]                  # (1, 1, Hp)
            acc = acc + taps_w[kw][kh:kh + th] * wk
    s2 = s2_ref[...].reshape(1, 1, hidp)
    b2 = b2_ref[...].reshape(1, 1, hidp)
    dw = jnp.clip(acc * s2 + b2, 0.0, RELU6_MAX)

    # ---- 1x1 project conv + BN (no activation) : (TH*W, Hp) @ (Hp, Op) ----
    out = jnp.dot(dw.reshape(th * W, hidp), w3_ref[...],
                  preferred_element_type=jnp.float32)
    out = (out * s3_ref[...] + b3_ref[...]).reshape(th, W, coutp)

    if use_shortcut:
        out = out + x_mid                                      # Cp == Op here

    o_ref[...] = out.astype(o_ref.dtype)


def _pick_tile_h(H, W, hidp, budget_bytes=6 * 1024 * 1024):
    """Largest divisor of H whose per-step f32 working set fits the budget.

    ~8 live copies of a (tile_h+2, W, hidp) hidden-activation slab dominate the
    per-step footprint; a 6 MiB budget leaves ample headroom for double-buffered
    IO even on v7x's 64 MiB VMEM.
    """
    per_row = W * hidp * 4 * 8
    cap = max(1, budget_bytes // per_row - 2)
    best = 1
    for th in range(1, H + 1):
        if H % th == 0 and th <= cap:
            best = th
    return best


def inverted_residual(x_nchw, params, *, stride=1, expand_ratio=2, tile_h=None):
    """Forward pass matching the PyTorch InvertedResidual module (eval-mode BN).

    Accepts the PyTorch-style NCHW input; transpose + channel padding to a
    lane-dense NHWC layout (and back) is wrapper-side layout plumbing only.
    """
    # TODO(synk): stride > 1 depthwise path is not implemented in this kernel.
    assert stride == 1, "kernel implements stride=1 depthwise conv only"
    N, Cin, H, W = x_nchw.shape
    hid = params["wdw"].shape[-1]
    Cout = params["w3"].shape[-1]
    use_shortcut = (stride == 1 and Cin == Cout)
    expand = expand_ratio != 1

    # ---- pad channel dims to full 128-lane vregs (zero pads are exact no-ops) ----
    cinp = _round_up(Cin, LANES)
    coutp = _round_up(Cout, LANES)
    if use_shortcut:
        cinp = coutp = max(cinp, coutp)
    hidp = cinp if not expand else _round_up(hid, LANES)

    f32 = jnp.float32
    x = jnp.transpose(x_nchw, (0, 2, 3, 1)).astype(f32)        # NCHW -> NHWC
    x = jnp.pad(x, ((0, 0), (0, 0), (0, 0), (0, cinp - Cin)))

    def pad2(a, r, c):
        a = a.astype(f32)
        return jnp.pad(a, ((0, r - a.shape[0]), (0, c - a.shape[1])))

    wdwp = jnp.pad(params["wdw"].astype(f32), ((0, 0), (0, 0), (0, hidp - hid)))
    s2p, b2p = pad2(params["s2"], 1, hidp), pad2(params["b2"], 1, hidp)
    w3p = pad2(params["w3"], hidp, coutp)
    s3p, b3p = pad2(params["s3"], 1, coutp), pad2(params["b3"], 1, coutp)

    if tile_h is None:
        tile_h = _pick_tile_h(H, W, hidp)
    assert H % tile_h == 0, "tile_h must divide H"
    th = tile_h
    n_tiles = H // th

    # ---- BlockSpecs ----
    def const_spec(shape):
        zeros = (0,) * len(shape)
        return pl.BlockSpec(shape, lambda n, t, _z=zeros: _z)

    x_main_spec = pl.BlockSpec((None, th, W, cinp), lambda n, t: (n, t, 0, 0))
    # Halo rows: H block size 1, so the index map addresses rows directly;
    # clamped at the border, and the corresponding h rows are zeroed in-kernel.
    x_top_spec = pl.BlockSpec(
        (None, 1, W, cinp),
        lambda n, t: (n, jnp.maximum(t * th - 1, 0), 0, 0))
    x_bot_spec = pl.BlockSpec(
        (None, 1, W, cinp),
        lambda n, t: (n, jnp.minimum((t + 1) * th, H - 1), 0, 0))

    in_specs = [x_top_spec, x_main_spec, x_bot_spec]
    args = [x, x, x]
    if expand:
        w1p = pad2(params["w1"], cinp, hidp)
        s1p, b1p = pad2(params["s1"], 1, hidp), pad2(params["b1"], 1, hidp)
        in_specs += [const_spec((cinp, hidp)), const_spec((1, hidp)),
                     const_spec((1, hidp))]
        args += [w1p, s1p, b1p]
    in_specs += [const_spec((3, 3, hidp)), const_spec((1, hidp)),
                 const_spec((1, hidp)), const_spec((hidp, coutp)),
                 const_spec((1, coutp)), const_spec((1, coutp))]
    args += [wdwp, s2p, b2p, w3p, s3p, b3p]

    kernel = functools.partial(_inverted_residual_kernel,
                               expand=expand, use_shortcut=use_shortcut)

    out_padded = pl.pallas_call(
        kernel,
        out_shape=jax.ShapeDtypeStruct((N, H, W, coutp), f32),
        grid_spec=pltpu.PrefetchScalarGridSpec(
            num_scalar_prefetch=0,
            grid=(N, n_tiles),
            in_specs=in_specs,
            out_specs=pl.BlockSpec((None, th, W, coutp),
                                   lambda n, t: (n, t, 0, 0)),
        ),
        compiler_params=pltpu.CompilerParams(
            dimension_semantics=("parallel", "parallel")),
    )(*args)

    out = out_padded[..., :Cout]
    return jnp.transpose(out, (0, 3, 1, 2))                    # NHWC -> NCHW


# --------------------------- parameter construction ---------------------------

def fold_bn(gamma, beta, mean, var):
    scale = gamma / jnp.sqrt(var + BN_EPS)
    bias = beta - mean * scale
    return scale.reshape(1, -1), bias.reshape(1, -1)


def make_params(key, in_channels, out_channels, expand_ratio):
    hid = in_channels * expand_ratio
    ks = jax.random.split(key, 15)

    def bn_params(k, c):
        k1, k2, k3, k4 = jax.random.split(k, 4)
        gamma = 1.0 + 0.1 * jax.random.normal(k1, (c,), jnp.float32)
        beta = 0.1 * jax.random.normal(k2, (c,), jnp.float32)
        mean = 0.1 * jax.random.normal(k3, (c,), jnp.float32)
        var = 0.5 + jnp.abs(jax.random.normal(k4, (c,), jnp.float32))
        return gamma, beta, mean, var

    # expand 1x1 conv (PyTorch weight (hid, Cin, 1, 1) -> (Cin, hid) matmul)
    w1 = 0.2 * jax.random.normal(ks[0], (in_channels, hid), jnp.float32)
    s1, b1 = fold_bn(*bn_params(ks[1], hid))
    # depthwise 3x3 conv (PyTorch weight (hid, 1, 3, 3) -> (3, 3, hid))
    wdw = 0.2 * jax.random.normal(ks[2], (3, 3, hid), jnp.float32)
    s2, b2 = fold_bn(*bn_params(ks[3], hid))
    # project 1x1 conv (PyTorch weight (Cout, hid, 1, 1) -> (hid, Cout))
    w3 = 0.2 * jax.random.normal(ks[4], (hid, out_channels), jnp.float32)
    s3, b3 = fold_bn(*bn_params(ks[5], out_channels))

    return dict(w1=w1, s1=s1, b1=b1, wdw=wdw, s2=s2, b2=b2,
                w3=w3, s3=s3, b3=b3)


# ------------------------------ pure-JAX reference ------------------------------

def reference(x_nchw, params, *, stride=1, expand_ratio=2):
    x = jnp.transpose(x_nchw, (0, 2, 3, 1)).astype(jnp.float32)   # NHWC
    hid = params["wdw"].shape[-1]
    Cin = x.shape[-1]
    Cout = params["w3"].shape[-1]
    y = x
    if expand_ratio != 1:
        y = jnp.einsum("nhwc,cd->nhwd", y, params["w1"])
        y = jnp.clip(y * params["s1"] + params["b1"], 0.0, RELU6_MAX)
    # depthwise 3x3, stride 1, padding 1
    y = lax.conv_general_dilated(
        y, params["wdw"].reshape(3, 3, 1, hid),
        window_strides=(stride, stride), padding=((1, 1), (1, 1)),
        dimension_numbers=("NHWC", "HWIO", "NHWC"),
        feature_group_count=hid)
    y = jnp.clip(y * params["s2"] + params["b2"], 0.0, RELU6_MAX)
    y = jnp.einsum("nhwc,cd->nhwd", y, params["w3"])
    y = y * params["s3"] + params["b3"]
    if stride == 1 and Cin == Cout:
        y = y + x
    return jnp.transpose(y, (0, 3, 1, 2))


if __name__ == "__main__":
    key = jax.random.PRNGKey(0)
    kx1, kp1, kx2, kp2 = jax.random.split(key, 4)

    # Config A: expand_ratio=2, Cin == Cout -> residual shortcut; 2 row tiles.
    N, Cin, Cout, Hsp, Wsp = 2, 4, 4, 16, 16
    x1 = jax.random.normal(kx1, (N, Cin, Hsp, Wsp), jnp.float32)
    p1 = make_params(kp1, Cin, Cout, 2)
    out1 = jax.block_until_ready(
        inverted_residual(x1, p1, stride=1, expand_ratio=2, tile_h=8))
    ref1 = jax.block_until_ready(reference(x1, p1, stride=1, expand_ratio=2))
    np.testing.assert_allclose(np.asarray(out1), np.asarray(ref1),
                               rtol=1e-4, atol=1e-4)

    # Config B: expand_ratio=1 (no expand conv), Cin != Cout -> no shortcut.
    Cin2, Cout2 = 4, 8
    x2 = jax.random.normal(kx2, (N, Cin2, Hsp, Wsp), jnp.float32)
    p2 = make_params(kp2, Cin2, Cout2, 1)
    out2 = jax.block_until_ready(
        inverted_residual(x2, p2, stride=1, expand_ratio=1, tile_h=8))
    ref2 = jax.block_until_ready(reference(x2, p2, stride=1, expand_ratio=1))
    np.testing.assert_allclose(np.asarray(out2), np.asarray(ref2),
                               rtol=1e-4, atol=1e-4)

    print("KERNEL_OK")
</pallas_src>

<mosaic_0001>
module attributes {stable_mosaic.version = 11 : i64} {
  func.func @_inverted_residual_kernel(%arg0: i32, %arg1: i32, %arg2: memref<1x1x16x128xf32, #tpu.memory_space<vmem>>, %arg3: memref<1x8x16x128xf32, #tpu.memory_space<vmem>>, %arg4: memref<1x1x16x128xf32, #tpu.memory_space<vmem>>, %arg5: memref<128x128xf32, #tpu.memory_space<vmem>>, %arg6: memref<1x128xf32, #tpu.memory_space<vmem>>, %arg7: memref<1x128xf32, #tpu.memory_space<vmem>>, %arg8: memref<3x3x128xf32, #tpu.memory_space<vmem>>, %arg9: memref<1x128xf32, #tpu.memory_space<vmem>>, %arg10: memref<1x128xf32, #tpu.memory_space<vmem>>, %arg11: memref<128x128xf32, #tpu.memory_space<vmem>>, %arg12: memref<1x128xf32, #tpu.memory_space<vmem>>, %arg13: memref<1x128xf32, #tpu.memory_space<vmem>>, %arg14: memref<1x8x16x128xf32, #tpu.memory_space<vmem>>) attributes {dimension_semantics = [#tpu.dimension_semantics<parallel>, #tpu.dimension_semantics<parallel>], iteration_bounds = array<i64: 2, 2>, scalar_prefetch = 0 : i64, scratch_operands = 0 : i64, tpu.core_type = #tpu.core_type<tc>, window_params = [{transform_indices = @transform_0, window_bounds = array<i64: 1, 1, 16, 128>}, {transform_indices = @transform_1, window_bounds = array<i64: 1, 8, 16, 128>}, {transform_indices = @transform_2, window_bounds = array<i64: 1, 1, 16, 128>}, {pipeline_mode = #tpu.pipeline_mode<synchronous>, transform_indices = @transform_3, window_bounds = array<i64: 128, 128>}, {pipeline_mode = #tpu.pipeline_mode<synchronous>, transform_indices = @transform_4, window_bounds = array<i64: 1, 128>}, {pipeline_mode = #tpu.pipeline_mode<synchronous>, transform_indices = @transform_5, window_bounds = array<i64: 1, 128>}, {pipeline_mode = #tpu.pipeline_mode<synchronous>, transform_indices = @transform_6, window_bounds = array<i64: 3, 3, 128>}, {pipeline_mode = #tpu.pipeline_mode<synchronous>, transform_indices = @transform_7, window_bounds = array<i64: 1, 128>}, {pipeline_mode = #tpu.pipeline_mode<synchronous>, transform_indices = @transform_8, window_bounds = array<i64: 1, 128>}, {pipeline_mode = #tpu.pipeline_mode<synchronous>, transform_indices = @transform_9, window_bounds = array<i64: 128, 128>}, {pipeline_mode = #tpu.pipeline_mode<synchronous>, transform_indices = @transform_10, window_bounds = array<i64: 1, 128>}, {pipeline_mode = #tpu.pipeline_mode<synchronous>, transform_indices = @transform_11, window_bounds = array<i64: 1, 128>}, {transform_indices = @transform_12, window_bounds = array<i64: 1, 8, 16, 128>}]} {
    %c0_i32 = arith.constant 0 : i32
    %0 = arith.cmpi eq, %arg1, %c0_i32 : i32
    %c1_i32 = arith.constant 1 : i32
    %1 = arith.cmpi eq, %arg1, %c1_i32 : i32
    %c0 = arith.constant 0 : index
    %c0_0 = arith.constant 0 : index
    %c0_1 = arith.constant 0 : index
    %c0_2 = arith.constant 0 : index
    %2 = vector.load %arg3[%c0, %c0_0, %c0_1, %c0_2] : memref<1x8x16x128xf32, #tpu.memory_space<vmem>>, vector<1x8x16x128xf32>
    %3 = vector.shape_cast %2 : vector<1x8x16x128xf32> to vector<8x16x128xf32>
    %c0_3 = arith.constant 0 : index
    %c0_4 = arith.constant 0 : index
    %c0_5 = arith.constant 0 : index
    %c0_6 = arith.constant 0 : index
    %4 = vector.load %arg2[%c0_3, %c0_4, %c0_5, %c0_6] : memref<1x1x16x128xf32, #tpu.memory_space<vmem>>, vector<1x1x16x128xf32>
    %5 = vector.shape_cast %4 : vector<1x1x16x128xf32> to vector<1x16x128xf32>
    %c0_7 = arith.constant 0 : index
    %c0_8 = arith.constant 0 : index
    %c0_9 = arith.constant 0 : index
    %c0_10 = arith.constant 0 : index
    %6 = vector.load %arg4[%c0_7, %c0_8, %c0_9, %c0_10] : memref<1x1x16x128xf32, #tpu.memory_space<vmem>>, vector<1x1x16x128xf32>
    %7 = vector.shape_cast %6 : vector<1x1x16x128xf32> to vector<1x16x128xf32>
    %8 = tpu.concatenate %5, %3, %7 in 0 : vector<1x16x128xf32>, vector<8x16x128xf32>, vector<1x16x128xf32> -> vector<10x16x128xf32>
    %9 = vector.shape_cast %8 : vector<10x16x128xf32> to vector<160x128xf32>
    %c0_11 = arith.constant 0 : index
    %c0_12 = arith.constant 0 : index
    %10 = vector.load %arg5[%c0_11, %c0_12] : memref<128x128xf32, #tpu.memory_space<vmem>>, vector<128x128xf32>
    %cst = arith.constant dense<0.000000e+00> : vector<160x128xf32>
    %11 = tpu.matmul %9, %10, %cst {dimension_numbers = #tpu.dot_dimension_numbers<[1], [0], [0], [1], [0, 0, 1, 1], [], []>} : vector<160x128xf32>, vector<128x128xf32>, vector<160x128xf32> -> vector<160x128xf32>
    %c0_13 = arith.constant 0 : index
    %c0_14 = arith.constant 0 : index
    %12 = vector.load %arg6[%c0_13, %c0_14] : memref<1x128xf32, #tpu.memory_space<vmem>>, vector<1x128xf32>
    %13 = vector.broadcast %12 : vector<1x128xf32> to vector<160x128xf32>
    %14 = arith.mulf %11, %13 : vector<160x128xf32>
    %c0_15 = arith.constant 0 : index
    %c0_16 = arith.constant 0 : index
    %15 = vector.load %arg7[%c0_15, %c0_16] : memref<1x128xf32, #tpu.memory_space<vmem>>, vector<1x128xf32>
    %16 = vector.broadcast %15 : vector<1x128xf32> to vector<160x128xf32>
    %17 = arith.addf %14, %16 : vector<160x128xf32>
    %cst_17 = arith.constant 0.000000e+00 : f32
    %cst_18 = arith.constant 6.000000e+00 : f32
    %18 = vector.broadcast %cst_17 : f32 to vector<160x128xf32>
    %19 = arith.maximumf %18, %17 : vector<160x128xf32>
    %20 = vector.broadcast %cst_18 : f32 to vector<160x128xf32>
    %21 = arith.minimumf %20, %19 : vector<160x128xf32>
    %22 = vector.shape_cast %21 : vector<160x128xf32> to vector<10x16x128xf32>
    %cst_19 = arith.constant 0.000000e+00 : f32
    %23 = vector.broadcast %cst_19 : f32 to vector<1x16x128xf32>
    %24 = vector.extract_strided_slice %22 {offsets = [0, 0, 0], sizes = [1, 16, 128], strides = [1, 1, 1]} : vector<10x16x128xf32> to vector<1x16x128xf32>
    %25 = arith.select %0, %23, %24 : vector<1x16x128xf32>
    %26 = vector.extract_strided_slice %22 {offsets = [9, 0, 0], sizes = [1, 16, 128], strides = [1, 1, 1]} : vector<10x16x128xf32> to vector<1x16x128xf32>
    %27 = arith.select %1, %23, %26 : vector<1x16x128xf32>
    %28 = vector.extract_strided_slice %22 {offsets = [1, 0, 0], sizes = [8, 16, 128], strides = [1, 1, 1]} : vector<10x16x128xf32> to vector<8x16x128xf32>
    %29 = tpu.concatenate %25, %28, %27 in 0 : vector<1x16x128xf32>, vector<8x16x128xf32>, vector<1x16x128xf32> -> vector<10x16x128xf32>
    %cst_20 = arith.constant 0.000000e+00 : f32
    %30 = vector.broadcast %cst_20 : f32 to vector<10x1x128xf32>
    %31 = vector.extract_strided_slice %29 {offsets = [0, 0, 0], sizes = [10, 15, 128], strides = [1, 1, 1]} : vector<10x16x128xf32> to vector<10x15x128xf32>
    %32 = tpu.concatenate %30, %31 in 1 : vector<10x1x128xf32>, vector<10x15x128xf32> -> vector<10x16x128xf32>
    %33 = vector.extract_strided_slice %29 {offsets = [0, 1, 0], sizes = [10, 15, 128], strides = [1, 1, 1]} : vector<10x16x128xf32> to vector<10x15x128xf32>
    %34 = tpu.concatenate %33, %30 in 1 : vector<10x15x128xf32>, vector<10x1x128xf32> -> vector<10x16x128xf32>
    %c0_21 = arith.constant 0 : index
    %c0_22 = arith.constant 0 : index
    %c0_23 = arith.constant 0 : index
    %35 = vector.load %arg8[%c0_21, %c0_22, %c0_23] : memref<3x3x128xf32, #tpu.memory_space<vmem>>, vector<3x3x128xf32>
    %cst_24 = arith.constant 0.000000e+00 : f32
    %36 = vector.broadcast %cst_24 : f32 to vector<8x16x128xf32>
    %37 = vector.extract_strided_slice %35 {offsets = [0, 0, 0], sizes = [1, 1, 128], strides = [1, 1, 1]} : vector<3x3x128xf32> to vector<1x1x128xf32>
    %38 = vector.extract_strided_slice %32 {offsets = [0, 0, 0], sizes = [8, 16, 128], strides = [1, 1, 1]} : vector<10x16x128xf32> to vector<8x16x128xf32>
    %39 = vector.broadcast %37 : vector<1x1x128xf32> to vector<8x16x128xf32>
    %40 = arith.mulf %38, %39 : vector<8x16x128xf32>
    %41 = arith.addf %36, %40 : vector<8x16x128xf32>
    %42 = vector.extract_strided_slice %35 {offsets = [0, 1, 0], sizes = [1, 1, 128], strides = [1, 1, 1]} : vector<3x3x128xf32> to vector<1x1x128xf32>
    %43 = vector.extract_strided_slice %29 {offsets = [0, 0, 0], sizes = [8, 16, 128], strides = [1, 1, 1]} : vector<10x16x128xf32> to vector<8x16x128xf32>
    %44 = vector.broadcast %42 : vector<1x1x128xf32> to vector<8x16x128xf32>
    %45 = arith.mulf %43, %44 : vector<8x16x128xf32>
    %46 = arith.addf %41, %45 : vector<8x16x128xf32>
    %47 = vector.extract_strided_slice %35 {offsets = [0, 2, 0], sizes = [1, 1, 128], strides = [1, 1, 1]} : vector<3x3x128xf32> to vector<1x1x128xf32>
    %48 = vector.extract_strided_slice %34 {offsets = [0, 0, 0], sizes = [8, 16, 128], strides = [1, 1, 1]} : vector<10x16x128xf32> to vector<8x16x128xf32>
    %49 = vector.broadcast %47 : vector<1x1x128xf32> to vector<8x16x128xf32>
    %50 = arith.mulf %48, %49 : vector<8x16x128xf32>
    %51 = arith.addf %46, %50 : vector<8x16x128xf32>
    %52 = vector.extract_strided_slice %35 {offsets = [1, 0, 0], sizes = [1, 1, 128], strides = [1, 1, 1]} : vector<3x3x128xf32> to vector<1x1x128xf32>
    %53 = vector.extract_strided_slice %32 {offsets = [1, 0, 0], sizes = [8, 16, 128], strides = [1, 1, 1]} : vector<10x16x128xf32> to vector<8x16x128xf32>
    %54 = vector.broadcast %52 : vector<1x1x128xf32> to vector<8x16x128xf32>
    %55 = arith.mulf %53, %54 : vector<8x16x128xf32>
    %56 = arith.addf %51, %55 : vector<8x16x128xf32>
    %57 = vector.extract_strided_slice %35 {offsets = [1, 1, 0], sizes = [1, 1, 128], strides = [1, 1, 1]} : vector<3x3x128xf32> to vector<1x1x128xf32>
    %58 = vector.extract_strided_slice %29 {offsets = [1, 0, 0], sizes = [8, 16, 128], strides = [1, 1, 1]} : vector<10x16x128xf32> to vector<8x16x128xf32>
    %59 = vector.broadcast %57 : vector<1x1x128xf32> to vector<8x16x128xf32>
    %60 = arith.mulf %58, %59 : vector<8x16x128xf32>
    %61 = arith.addf %56, %60 : vector<8x16x128xf32>
    %62 = vector.extract_strided_slice %35 {offsets = [1, 2, 0], sizes = [1, 1, 128], strides = [1, 1, 1]} : vector<3x3x128xf32> to vector<1x1x128xf32>
    %63 = vector.extract_strided_slice %34 {offsets = [1, 0, 0], sizes = [8, 16, 128], strides = [1, 1, 1]} : vector<10x16x128xf32> to vector<8x16x128xf32>
    %64 = vector.broadcast %62 : vector<1x1x128xf32> to vector<8x16x128xf32>
    %65 = arith.mulf %63, %64 : vector<8x16x128xf32>
    %66 = arith.addf %61, %65 : vector<8x16x128xf32>
    %67 = vector.extract_strided_slice %35 {offsets = [2, 0, 0], sizes = [1, 1, 128], strides = [1, 1, 1]} : vector<3x3x128xf32> to vector<1x1x128xf32>
    %68 = vector.extract_strided_slice %32 {offsets = [2, 0, 0], sizes = [8, 16, 128], strides = [1, 1, 1]} : vector<10x16x128xf32> to vector<8x16x128xf32>
    %69 = vector.broadcast %67 : vector<1x1x128xf32> to vector<8x16x128xf32>
    %70 = arith.mulf %68, %69 : vector<8x16x128xf32>
    %71 = arith.addf %66, %70 : vector<8x16x128xf32>
    %72 = vector.extract_strided_slice %35 {offsets = [2, 1, 0], sizes = [1, 1, 128], strides = [1, 1, 1]} : vector<3x3x128xf32> to vector<1x1x128xf32>
    %73 = vector.extract_strided_slice %29 {offsets = [2, 0, 0], sizes = [8, 16, 128], strides = [1, 1, 1]} : vector<10x16x128xf32> to vector<8x16x128xf32>
    %74 = vector.broadcast %72 : vector<1x1x128xf32> to vector<8x16x128xf32>
    %75 = arith.mulf %73, %74 : vector<8x16x128xf32>
    %76 = arith.addf %71, %75 : vector<8x16x128xf32>
    %77 = vector.extract_strided_slice %35 {offsets = [2, 2, 0], sizes = [1, 1, 128], strides = [1, 1, 1]} : vector<3x3x128xf32> to vector<1x1x128xf32>
    %78 = vector.extract_strided_slice %34 {offsets = [2, 0, 0], sizes = [8, 16, 128], strides = [1, 1, 1]} : vector<10x16x128xf32> to vector<8x16x128xf32>
    %79 = vector.broadcast %77 : vector<1x1x128xf32> to vector<8x16x128xf32>
    %80 = arith.mulf %78, %79 : vector<8x16x128xf32>
    %81 = arith.addf %76, %80 : vector<8x16x128xf32>
    %c0_25 = arith.constant 0 : index
    %c0_26 = arith.constant 0 : index
    %82 = vector.load %arg9[%c0_25, %c0_26] : memref<1x128xf32, #tpu.memory_space<vmem>>, vector<1x128xf32>
    %83 = vector.shape_cast %82 : vector<1x128xf32> to vector<1x1x128xf32>
    %c0_27 = arith.constant 0 : index
    %c0_28 = arith.constant 0 : index
    %84 = vector.load %arg10[%c0_27, %c0_28] : memref<1x128xf32, #tpu.memory_space<vmem>>, vector<1x128xf32>
    %85 = vector.shape_cast %84 : vector<1x128xf32> to vector<1x1x128xf32>
    %86 = vector.broadcast %83 : vector<1x1x128xf32> to vector<8x16x128xf32>
    %87 = arith.mulf %81, %86 : vector<8x16x128xf32>
    %88 = vector.broadcast %85 : vector<1x1x128xf32> to vector<8x16x128xf32>
    %89 = arith.addf %87, %88 : vector<8x16x128xf32>
    %cst_29 = arith.constant 0.000000e+00 : f32
    %cst_30 = arith.constant 6.000000e+00 : f32
    %90 = vector.broadcast %cst_29 : f32 to vector<8x16x128xf32>
    %91 = arith.maximumf %90, %89 : vector<8x16x128xf32>
    %92 = vector.broadcast %cst_30 : f32 to vector<8x16x128xf32>
    %93 = arith.minimumf %92, %91 : vector<8x16x128xf32>
    %94 = vector.shape_cast %93 : vector<8x16x128xf32> to vector<128x128xf32>
    %c0_31 = arith.constant 0 : index
    %c0_32 = arith.constant 0 : index
    %95 = vector.load %arg11[%c0_31, %c0_32] : memref<128x128xf32, #tpu.memory_space<vmem>>, vector<128x128xf32>
    %cst_33 = arith.constant dense<0.000000e+00> : vector<128x128xf32>
    %96 = tpu.matmul %94, %95, %cst_33 {dimension_numbers = #tpu.dot_dimension_numbers<[1], [0], [0], [1], [0, 0, 1, 1], [], []>} : vector<128x128xf32>, vector<128x128xf32>, vector<128x128xf32> -> vector<128x128xf32>
    %c0_34 = arith.constant 0 : index
    %c0_35 = arith.constant 0 : index
    %97 = vector.load %arg12[%c0_34, %c0_35] : memref<1x128xf32, #tpu.memory_space<vmem>>, vector<1x128xf32>
    %98 = vector.broadcast %97 : vector<1x128xf32> to vector<128x128xf32>
    %99 = arith.mulf %96, %98 : vector<128x128xf32>
    %c0_36 = arith.constant 0 : index
    %c0_37 = arith.constant 0 : index
    %100 = vector.load %arg13[%c0_36, %c0_37] : memref<1x128xf32, #tpu.memory_space<vmem>>, vector<1x128xf32>
    %101 = vector.broadcast %100 : vector<1x128xf32> to vector<128x128xf32>
    %102 = arith.addf %99, %101 : vector<128x128xf32>
    %103 = vector.shape_cast %102 : vector<128x128xf32> to vector<8x16x128xf32>
    %104 = arith.addf %103, %3 : vector<8x16x128xf32>
    %c0_38 = arith.constant 0 : index
    %c0_39 = arith.constant 0 : index
    %c0_40 = arith.constant 0 : index
    %c0_41 = arith.constant 0 : index
    %105 = vector.load %arg14[%c0_38, %c0_39, %c0_40, %c0_41] : memref<1x8x16x128xf32, #tpu.memory_space<vmem>>, vector<1x8x16x128xf32>
    %106 = vector.shape_cast %105 : vector<1x8x16x128xf32> to vector<8x16x128xf32>
    %107 = vector.shape_cast %104 : vector<8x16x128xf32> to vector<1x8x16x128xf32>
    tpu.vector_store %arg14[%c0_38, %c0_39, %c0_40, %c0_41], %107 {strides = array<i32>} : memref<1x8x16x128xf32, #tpu.memory_space<vmem>>, vector<1x8x16x128xf32>,
    return
  }
  func.func @transform_0(%arg0: i32, %arg1: i32) -> (i32, i32, i32, i32) {
    %c8_i32 = arith.constant 8 : i32
    %0 = arith.muli %arg1, %c8_i32 : i32
    %c1_i32 = arith.constant 1 : i32
    %1 = arith.subi %0, %c1_i32 : i32
    %c0_i32 = arith.constant 0 : i32
    %2 = arith.maxsi %1, %c0_i32 : i32
    %c0_i32_0 = arith.constant 0 : i32
    %c0_i32_1 = arith.constant 0 : i32
    %c0_i32_2 = arith.constant 0 : i32
    return %arg0, %2, %c0_i32_0, %c0_i32_1 : i32, i32, i32, i32
  }
  func.func @transform_1(%arg0: i32, %arg1: i32) -> (i32, i32, i32, i32) {
    %c0_i32 = arith.constant 0 : i32
    %c0_i32_0 = arith.constant 0 : i32
    %c0_i32_1 = arith.constant 0 : i32
    return %arg0, %arg1, %c0_i32, %c0_i32_0 : i32, i32, i32, i32
  }
  func.func @transform_2(%arg0: i32, %arg1: i32) -> (i32, i32, i32, i32) {
    %c1_i32 = arith.constant 1 : i32
    %0 = arith.addi %arg1, %c1_i32 : i32
    %c8_i32 = arith.constant 8 : i32
    %1 = arith.muli %0, %c8_i32 : i32
    %c15_i32 = arith.constant 15 : i32
    %2 = arith.minsi %1, %c15_i32 : i32
    %c0_i32 = arith.constant 0 : i32
    %c0_i32_0 = arith.constant 0 : i32
    %c0_i32_1 = arith.constant 0 : i32
    return %arg0, %2, %c0_i32, %c0_i32_0 : i32, i32, i32, i32
  }
  func.func @transform_3(%arg0: i32, %arg1: i32) -> (i32, i32) {
    %c0_i32 = arith.constant 0 : i32
    %c0_i32_0 = arith.constant 0 : i32
    %c0_i32_1 = arith.constant 0 : i32
    return %c0_i32, %c0_i32_0 : i32, i32
  }
  func.func @transform_4(%arg0: i32, %arg1: i32) -> (i32, i32) {
    %c0_i32 = arith.constant 0 : i32
    %c0_i32_0 = arith.constant 0 : i32
    %c0_i32_1 = arith.constant 0 : i32
    return %c0_i32, %c0_i32_0 : i32, i32
  }
  func.func @transform_5(%arg0: i32, %arg1: i32) -> (i32, i32) {
    %c0_i32 = arith.constant 0 : i32
    %c0_i32_0 = arith.constant 0 : i32
    %c0_i32_1 = arith.constant 0 : i32
    return %c0_i32, %c0_i32_0 : i32, i32
  }
  func.func @transform_6(%arg0: i32, %arg1: i32) -> (i32, i32, i32) {
    %c0_i32 = arith.constant 0 : i32
    %c0_i32_0 = arith.constant 0 : i32
    %c0_i32_1 = arith.constant 0 : i32
    %c0_i32_2 = arith.constant 0 : i32
    return %c0_i32, %c0_i32_0, %c0_i32_1 : i32, i32, i32
  }
  func.func @transform_7(%arg0: i32, %arg1: i32) -> (i32, i32) {
    %c0_i32 = arith.constant 0 : i32
    %c0_i32_0 = arith.constant 0 : i32
    %c0_i32_1 = arith.constant 0 : i32
    return %c0_i32, %c0_i32_0 : i32, i32
  }
  func.func @transform_8(%arg0: i32, %arg1: i32) -> (i32, i32) {
    %c0_i32 = arith.constant 0 : i32
    %c0_i32_0 = arith.constant 0 : i32
    %c0_i32_1 = arith.constant 0 : i32
    return %c0_i32, %c0_i32_0 : i32, i32
  }
  func.func @transform_9(%arg0: i32, %arg1: i32) -> (i32, i32) {
    %c0_i32 = arith.constant 0 : i32
    %c0_i32_0 = arith.constant 0 : i32
    %c0_i32_1 = arith.constant 0 : i32
    return %c0_i32, %c0_i32_0 : i32, i32
  }
  func.func @transform_10(%arg0: i32, %arg1: i32) -> (i32, i32) {
    %c0_i32 = arith.constant 0 : i32
    %c0_i32_0 = arith.constant 0 : i32
    %c0_i32_1 = arith.constant 0 : i32
    return %c0_i32, %c0_i32_0 : i32, i32
  }
  func.func @transform_11(%arg0: i32, %arg1: i32) -> (i32, i32) {
    %c0_i32 = arith.constant 0 : i32
    %c0_i32_0 = arith.constant 0 : i32
    %c0_i32_1 = arith.constant 0 : i32
    return %c0_i32, %c0_i32_0 : i32, i32
  }
  func.func @transform_12(%arg0: i32, %arg1: i32) -> (i32, i32, i32, i32) {
    %c0_i32 = arith.constant 0 : i32
    %c0_i32_0 = arith.constant 0 : i32
    %c0_i32_1 = arith.constant 0 : i32
    return %arg0, %arg1, %c0_i32, %c0_i32_0 : i32, i32, i32, i32
  }
}

</mosaic_0001>

<llo_original>
// kernel: tpu_custom_call.1
$region0: #{tpu_custom_call.1}
  #allocation0 [shape = 'u32[]', space=smem, size = 0x4, offset = 0x4, fixed_abs, tag = 'smem constant byte address 0x4 - core index']
  #allocation1 [shape = 'u32[144,128]{1,0:T(1,128)}', space=vmem, size = 0x12000, scoped, tag = 'internal scratch']
  %s0 = inlined_call_operand.hbm [shape: f32[2,16,16,128], index: 0, kind: input, shape index: {}]
  %s1 = inlined_call_operand.hbm [shape: f32[2,16,16,128], index: 1, kind: input, shape index: {}]
  %s2 = inlined_call_operand.hbm [shape: f32[2,16,16,128], index: 2, kind: input, shape index: {}]
  %s3 = inlined_call_operand.hbm [shape: f32[128,128], index: 3, kind: input, shape index: {}]
  %s4 = inlined_call_operand.vmem [shape: f32[1,128], index: 4, kind: input, shape index: {}]
  %s5 = inlined_call_operand.vmem [shape: f32[1,128], index: 5, kind: input, shape index: {}]
  %s6 = inlined_call_operand.vmem [shape: f32[3,3,128], index: 6, kind: input, shape index: {}]
  %s7 = inlined_call_operand.vmem [shape: f32[1,128], index: 7, kind: input, shape index: {}]
  %s8 = inlined_call_operand.vmem [shape: f32[1,128], index: 8, kind: input, shape index: {}]
  %s9 = inlined_call_operand.hbm [shape: f32[128,128], index: 9, kind: input, shape index: {}]
  %s10 = inlined_call_operand.vmem [shape: f32[1,128], index: 10, kind: input, shape index: {}]
  %s11 = inlined_call_operand.vmem [shape: f32[1,128], index: 11, kind: input, shape index: {}]
  %s12 = inlined_call_operand.hbm [shape: f32[2,16,16,128], index: 12, kind: output, shape index: {}]
  %s13 = sld [smem:[#allocation0]]
  $region101: #{tpu_custom_call.1} parent=0
    _
  %s15 = ssub.s32 1, %s13
  %s16 = scalar_select 0, %s15, %s13
  $region1: #{tpu_custom_call.1} parent=0
    #allocation2 [shape = 'u8[16384]{0}', space=vmem, size = 0x4000, scoped, tag = 'input window, operand 0']
    #allocation3 [shape = 's32[2]{0}', space=sflag, size = 0x8, scoped, tag = 'scoped memory for tpu_custom_call.1']
    #allocation4 [shape = 's32[2]{0}', space=sflag, size = 0x8, scoped, tag = 'scoped memory for tpu_custom_call.1']
    #allocation5 [shape = 'u8[131072]{0}', space=vmem, size = 0x20000, scoped, tag = 'input window, operand 1']
    #allocation6 [shape = 's32[2]{0}', space=sflag, size = 0x8, scoped, tag = 'scoped memory for tpu_custom_call.1']
    #allocation7 [shape = 'u8[16384]{0}', space=vmem, size = 0x4000, scoped, tag = 'input window, operand 2']
    #allocation8 [shape = 'u8[65536]{0}', space=vmem, size = 0x10000, scoped, tag = 'input window, operand 3, single buffered']
    #allocation9 [shape = 's32[1]{0}', space=sflag, size = 0x4, scoped, tag = 'scoped memory for tpu_custom_call.1']
    #allocation10 [shape = 'u8[65536]{0}', space=vmem, size = 0x10000, scoped, tag = 'input window, operand 9, single buffered']
    #allocation11 [shape = 'u8[131072]{0}', space=vmem, size = 0x20000, scoped, tag = 'output window, operand 0']
    %17 = vsyncpa [#allocation3], 0
    %s18 = scalar_lea.sflag [#allocation3], 1
    %19 = vsyncpa %s18, 0
    %20 = vsyncpa [#allocation6], 0
    %s21 = scalar_lea.sflag [#allocation6], 1
    %22 = vsyncpa %s21, 0
    %23 = vsyncpa [#allocation9], 0
    %24 = vsyncpa [#allocation4], 0
    %s25 = scalar_lea.sflag [#allocation4], 1
    %26 = vsyncpa %s25, 0
    loop: start=0, step=1, limit=6
    $region2: #{tpu_custom_call.1} parent=1 // loop_pre_header
      _
    $region3: #{tpu_custom_call.1} parent=1 // loop_header
      %s28 = sphi 0, %s32
      %p29 = scmp.ge.s32.totalorder %s28, 6
      %s35 = sphi 0, %s47
      %s36 = sphi 0, %s43
      %s37 = sphi 0, %s35
      %s38 = sphi 0, %s36
      %s39 = sphi 0, %s37
      %s40 = sphi 0, %s38
      %s60 = sphi 0, %s62
      %s63 = sphi 0, %s60
      %s64 = sphi 0, %s63
      %s80 = sphi 0, %s64
      %s88 = sphi 0, %s90
      %s91 = sphi 0, %s88
      %s92 = sphi 0, %s91
      %s108 = sphi 0, %s92
      %s124 = sphi 0, %s126
      %s127 = sphi 0, %s124
      %s128 = sphi 0, %s127
      %s144 = sphi 0, %s128
      %s148 = sphi 0, %s148
      %s150 = sphi 0, %s148
      %s151 = sphi 0, %s150
      %s165 = sphi 0, %s151
      %s169 = sphi 0, %s169
      %s171 = sphi 0, %s169
      %s172 = sphi 0, %s171
      %s186 = sphi 0, %s172
      %s190 = sphi 0, %s190
      %s192 = sphi 0, %s190
      %s193 = sphi 0, %s192
      %s207 = sphi 0, %s193
      %s211 = sphi 0, %s211
      %s213 = sphi 0, %s211
      %s214 = sphi 0, %s213
      %s228 = sphi 0, %s214
      %s232 = sphi 0, %s232
      %s234 = sphi 0, %s232
      %s235 = sphi 0, %s234
      %s249 = sphi 0, %s235
      %s253 = sphi 0, %s253
      %s255 = sphi 0, %s253
      %s256 = sphi 0, %s255
      %s270 = sphi 0, %s256
      %s274 = sphi 0, %s274
      %s276 = sphi 0, %s274
      %s277 = sphi 0, %s276
      %s291 = sphi 0, %s277
      %s295 = sphi 0, %s295
      %s297 = sphi 0, %s295
      %s298 = sphi 0, %s297
      %s312 = sphi 0, %s298
      %s316 = sphi 0, %s316
      %s318 = sphi 0, %s316
      %s319 = sphi 0, %s318
      %s333 = sphi 0, %s319
      %s341 = sphi 0, %s343
      %s344 = sphi 0, %s341
      %s345 = sphi 0, %s344
      %s361 = sphi 0, %s345
    $region4: #{tpu_custom_call.1} parent=1 // loop_header_branch
      %31 = sbr.rel (%p29) target = $region8
    $region5: #{tpu_custom_call.1} parent=1 // loop_body
      %s33 = ssub.s32 %s28, 1
      %s34 = ssub.s32 %s28, 2
      %s41 = sadd.s32 1, %s36
      %p42 = scmp.ge.s32.totalorder %s41, 2
      %s43 = scalar_select %p42, 0, %s41
      %s44 = sadd.s32 1, %s35
      %s45 = scalar_select %p42, %s44, %s35
      %p46 = scmp.ge.s32.totalorder %s45, 2
      %s47 = scalar_select %p46, 0, %s45
      %s48 = smul.u32 %s36, 8
      %s49 = ssub.s32 %s48, 1
      %p50 = scmp.gt.s32.totalorder %s49, 0
      %s51 = scalar_select %p50, %s49, 0
      %s52 = smul.u32 %s43, 8
      %s53 = ssub.s32 %s52, 1
      %p54 = scmp.gt.s32.totalorder %s53, 0
      %s55 = scalar_select %p54, %s53, 0
      %s56 = ssub.s32 %s35, %s47
      %s57 = ssub.s32 %s51, %s55
      %s58 = sor.u32 %s56, %s57
      %p59 = scmp.eq.s32.totalorder %s58, 0
      %s61 = sadd.s32 %s60, 1
      %s62 = scalar_select %p59, %s60, %s61
      %p65 = pneg %p59
      %p66 = scmp.eq.s32.totalorder %s28, 3
      %p67 = por %p65, %p66
      %p68 = scmp.ne.s32.totalorder %s60, %s63
      %p69 = scmp.eq.s32.totalorder %s28, 0
      %p70 = por %p68, %p69
      %p71 = scmp.ne.s32.totalorder %s60, %s63
      %p72 = scmp.eq.s32.totalorder %s33, 3
      %p73 = por %p71, %p72
      %p74 = scmp.ne.s32.totalorder %s63, %s64
      %p75 = scmp.eq.s32.totalorder %s33, 0
      %p76 = por %p74, %p75
      %p77 = scmp.ne.s32.totalorder %s63, %s64
      %p78 = scmp.eq.s32.totalorder %s34, 3
      %p79 = por %p77, %p78
      %p81 = scmp.ne.s32.totalorder %s64, %s80
      %p82 = scmp.eq.s32.totalorder %s34, 0
      %p83 = por %p81, %p82
      %s84 = ssub.s32 %s35, %s47
      %s85 = ssub.s32 %s36, %s43
      %s86 = sor.u32 %s84, %s85
      %p87 = scmp.eq.s32.totalorder %s86, 0
      %s89 = sadd.s32 %s88, 1
      %s90 = scalar_select %p87, %s88, %s89
      %p93 = pneg %p87
      %p94 = scmp.eq.s32.totalorder %s28, 3
      %p95 = por %p93, %p94
      %p96 = scmp.ne.s32.totalorder %s88, %s91
      %p97 = scmp.eq.s32.totalorder %s28, 0
      %p98 = por %p96, %p97
      %p99 = scmp.ne.s32.totalorder %s88, %s91
      %p100 = scmp.eq.s32.totalorder %s33, 3
      %p101 = por %p99, %p100
      %p102 = scmp.ne.s32.totalorder %s91, %s92
      %p103 = scmp.eq.s32.totalorder %s33, 0
      %p104 = por %p102, %p103
      %p105 = scmp.ne.s32.totalorder %s91, %s92
      %p106 = scmp.eq.s32.totalorder %s34, 3
      %p107 = por %p105, %p106
      %p109 = scmp.ne.s32.totalorder %s92, %s108
      %p110 = scmp.eq.s32.totalorder %s34, 0
      %p111 = por %p109, %p110
      %s112 = sadd.s32 %s36, 1
      %s113 = smul.u32 %s112, 8
      %p114 = scmp.lt.s32.totalorder %s113, 15
      %s115 = scalar_select %p114, %s113, 15
      %s116 = sadd.s32 %s43, 1
      %s117 = smul.u32 %s116, 8
      %p118 = scmp.lt.s32.totalorder %s117, 15
      %s119 = scalar_select %p118, %s117, 15
      %s120 = ssub.s32 %s35, %s47
      %s121 = ssub.s32 %s115, %s119
      %s122 = sor.u32 %s120, %s121
      %p123 = scmp.eq.s32.totalorder %s122, 0
      %s125 = sadd.s32 %s124, 1
      %s126 = scalar_select %p123, %s124, %s125
      %p129 = pneg %p123
      %p130 = scmp.eq.s32.totalorder %s28, 3
      %p131 = por %p129, %p130
      %p132 = scmp.ne.s32.totalorder %s124, %s127
      %p133 = scmp.eq.s32.totalorder %s28, 0
      %p134 = por %p132, %p133
      %p135 = scmp.ne.s32.totalorder %s124, %s127
      %p136 = scmp.eq.s32.totalorder %s33, 3
      %p137 = por %p135, %p136
      %p138 = scmp.ne.s32.totalorder %s127, %s128
      %p139 = scmp.eq.s32.totalorder %s33, 0
      %p140 = por %p138, %p139
      %p141 = scmp.ne.s32.totalorder %s127, %s128
      %p142 = scmp.eq.s32.totalorder %s34, 3
      %p143 = por %p141, %p142
      %p145 = scmp.ne.s32.totalorder %s128, %s144
      %p146 = scmp.eq.s32.totalorder %s34, 0
      %p147 = por %p145, %p146
      %s149 = sadd.s32 %s148, 1
      %p152 = scmp.eq.s32.totalorder %s28, 3
      %p153 = scmp.ne.s32.totalorder %s148, %s150
      %p154 = scmp.eq.s32.totalorder %s28, 0
      %p155 = por %p153, %p154
      %p156 = scmp.ne.s32.totalorder %s148, %s150
      %p157 = scmp.eq.s32.totalorder %s33, 3
      %p158 = por %p156, %p157
      %p159 = scmp.ne.s32.totalorder %s150, %s151
      %p160 = scmp.eq.s32.totalorder %s33, 0
      %p161 = por %p159, %p160
      %p162 = scmp.ne.s32.totalorder %s150, %s151
      %p163 = scmp.eq.s32.totalorder %s34, 3
      %p164 = por %p162, %p163
      %p166 = scmp.ne.s32.totalorder %s151, %s165
      %p167 = scmp.eq.s32.totalorder %s34, 0
      %p168 = por %p166, %p167
      %s170 = sadd.s32 %s169, 1
      %p173 = scmp.eq.s32.totalorder %s28, 3
      %p174 = scmp.ne.s32.totalorder %s169, %s171
      %p175 = scmp.eq.s32.totalorder %s28, 0
      %p176 = por %p174, %p175
      %p177 = scmp.ne.s32.totalorder %s169, %s171
      %p178 = scmp.eq.s32.totalorder %s33, 3
      %p179 = por %p177, %p178
      %p180 = scmp.ne.s32.totalorder %s171, %s172
      %p181 = scmp.eq.s32.totalorder %s33, 0
      %p182 = por %p180, %p181
      %p183 = scmp.ne.s32.totalorder %s171, %s172
      %p184 = scmp.eq.s32.totalorder %s34, 3
      %p185 = por %p183, %p184
      %p187 = scmp.ne.s32.totalorder %s172, %s186
      %p188 = scmp.eq.s32.totalorder %s34, 0
      %p189 = por %p187, %p188
      %s191 = sadd.s32 %s190, 1
      %p194 = scmp.eq.s32.totalorder %s28, 3
      %p195 = scmp.ne.s32.totalorder %s190, %s192
      %p196 = scmp.eq.s32.totalorder %s28, 0
      %p197 = por %p195, %p196
      %p198 = scmp.ne.s32.totalorder %s190, %s192
      %p199 = scmp.eq.s32.totalorder %s33, 3
      %p200 = por %p198, %p199
      %p201 = scmp.ne.s32.totalorder %s192, %s193
      %p202 = scmp.eq.s32.totalorder %s33, 0
      %p203 = por %p201, %p202
      %p204 = scmp.ne.s32.totalorder %s192, %s193
      %p205 = scmp.eq.s32.totalorder %s34, 3
      %p206 = por %p204, %p205
      %p208 = scmp.ne.s32.totalorder %s193, %s207
      %p209 = scmp.eq.s32.totalorder %s34, 0
      %p210 = por %p208, %p209
      %s212 = sadd.s32 %s211, 1
      %p215 = scmp.eq.s32.totalorder %s28, 3
      %p216 = scmp.ne.s32.totalorder %s211, %s213
      %p217 = scmp.eq.s32.totalorder %s28, 0
      %p218 = por %p216, %p217
      %p219 = scmp.ne.s32.totalorder %s211, %s213
      %p220 = scmp.eq.s32.totalorder %s33, 3
      %p221 = por %p219, %p220
      %p222 = scmp.ne.s32.totalorder %s213, %s214
      %p223 = scmp.eq.s32.totalorder %s33, 0
      %p224 = por %p222, %p223
      %p225 = scmp.ne.s32.totalorder %s213, %s214
      %p226 = scmp.eq.s32.totalorder %s34, 3
      %p227 = por %p225, %p226
      %p229 = scmp.ne.s32.totalorder %s214, %s228
      %p230 = scmp.eq.s32.totalorder %s34, 0
      %p231 = por %p229, %p230
      %s233 = sadd.s32 %s232, 1
      %p236 = scmp.eq.s32.totalorder %s28, 3
      %p237 = scmp.ne.s32.totalorder %s232, %s234
      %p238 = scmp.eq.s32.totalorder %s28, 0
      %p239 = por %p237, %p238
      %p240 = scmp.ne.s32.totalorder %s232, %s234
      %p241 = scmp.eq.s32.totalorder %s33, 3
      %p242 = por %p240, %p241
      %p243 = scmp.ne.s32.totalorder %s234, %s235
      %p244 = scmp.eq.s32.totalorder %s33, 0
      %p245 = por %p243, %p244
      %p246 = scmp.ne.s32.totalorder %s234, %s235
      %p247 = scmp.eq.s32.totalorder %s34, 3
      %p248 = por %p246, %p247
      %p250 = scmp.ne.s32.totalorder %s235, %s249
      %p251 = scmp.eq.s32.totalorder %s34, 0
      %p252 = por %p250, %p251
      %s254 = sadd.s32 %s253, 1
      %p257 = scmp.eq.s32.totalorder %s28, 3
      %p258 = scmp.ne.s32.totalorder %s253, %s255
      %p259 = scmp.eq.s32.totalorder %s28, 0
      %p260 = por %p258, %p259
      %p261 = scmp.ne.s32.totalorder %s253, %s255
      %p262 = scmp.eq.s32.totalorder %s33, 3
      %p263 = por %p261, %p262
      %p264 = scmp.ne.s32.totalorder %s255, %s256
      %p265 = scmp.eq.s32.totalorder %s33, 0
      %p266 = por %p264, %p265
      %p267 = scmp.ne.s32.totalorder %s255, %s256
      %p268 = scmp.eq.s32.totalorder %s34, 3
      %p269 = por %p267, %p268
      %p271 = scmp.ne.s32.totalorder %s256, %s270
      %p272 = scmp.eq.s32.totalorder %s34, 0
      %p273 = por %p271, %p272
      %s275 = sadd.s32 %s274, 1
      %p278 = scmp.eq.s32.totalorder %s28, 3
      %p279 = scmp.ne.s32.totalorder %s274, %s276
      %p280 = scmp.eq.s32.totalorder %s28, 0
      %p281 = por %p279, %p280
      %p282 = scmp.ne.s32.totalorder %s274, %s276
      %p283 = scmp.eq.s32.totalorder %s33, 3
      %p284 = por %p282, %p283
      %p285 = scmp.ne.s32.totalorder %s276, %s277
      %p286 = scmp.eq.s32.totalorder %s33, 0
      %p287 = por %p285, %p286
      %p288 = scmp.ne.s32.totalorder %s276, %s277
      %p289 = scmp.eq.s32.totalorder %s34, 3
      %p290 = por %p288, %p289
      %p292 = scmp.ne.s32.totalorder %s277, %s291
      %p293 = scmp.eq.s32.totalorder %s34, 0
      %p294 = por %p292, %p293
      %s296 = sadd.s32 %s295, 1
      %p299 = scmp.eq.s32.totalorder %s28, 3
      %p300 = scmp.ne.s32.totalorder %s295, %s297
      %p301 = scmp.eq.s32.totalorder %s28, 0
      %p302 = por %p300, %p301
      %p303 = scmp.ne.s32.totalorder %s295, %s297
      %p304 = scmp.eq.s32.totalorder %s33, 3
      %p305 = por %p303, %p304
      %p306 = scmp.ne.s32.totalorder %s297, %s298
      %p307 = scmp.eq.s32.totalorder %s33, 0
      %p308 = por %p306, %p307
      %p309 = scmp.ne.s32.totalorder %s297, %s298
      %p310 = scmp.eq.s32.totalorder %s34, 3
      %p311 = por %p309, %p310
      %p313 = scmp.ne.s32.totalorder %s298, %s312
      %p314 = scmp.eq.s32.totalorder %s34, 0
      %p315 = por %p313, %p314
      %s317 = sadd.s32 %s316, 1
      %p320 = scmp.eq.s32.totalorder %s28, 3
      %p321 = scmp.ne.s32.totalorder %s316, %s318
      %p322 = scmp.eq.s32.totalorder %s28, 0
      %p323 = por %p321, %p322
      %p324 = scmp.ne.s32.totalorder %s316, %s318
      %p325 = scmp.eq.s32.totalorder %s33, 3
      %p326 = por %p324, %p325
      %p327 = scmp.ne.s32.totalorder %s318, %s319
      %p328 = scmp.eq.s32.totalorder %s33, 0
      %p329 = por %p327, %p328
      %p330 = scmp.ne.s32.totalorder %s318, %s319
      %p331 = scmp.eq.s32.totalorder %s34, 3
      %p332 = por %p330, %p331
      %p334 = scmp.ne.s32.totalorder %s319, %s333
      %p335 = scmp.eq.s32.totalorder %s34, 0
      %p336 = por %p334, %p335
      %s337 = ssub.s32 %s35, %s47
      %s338 = ssub.s32 %s36, %s43
      %s339 = sor.u32 %s337, %s338
      %p340 = scmp.eq.s32.totalorder %s339, 0
      %s342 = sadd.s32 %s341, 1
      %s343 = scalar_select %p340, %s341, %s342
      %p346 = pneg %p340
      %p347 = scmp.eq.s32.totalorder %s28, 3
      %p348 = por %p346, %p347
      %p349 = scmp.ne.s32.totalorder %s341, %s344
      %p350 = scmp.eq.s32.totalorder %s28, 0
      %p351 = por %p349, %p350
      %p352 = scmp.ne.s32.totalorder %s341, %s344
      %p353 = scmp.eq.s32.totalorder %s33, 3
      %p354 = por %p352, %p353
      %p355 = scmp.ne.s32.totalorder %s344, %s345
      %p356 = scmp.eq.s32.totalorder %s33, 0
      %p357 = por %p355, %p356
      %p358 = scmp.ne.s32.totalorder %s344, %s345
      %p359 = scmp.eq.s32.totalorder %s34, 3
      %p360 = por %p358, %p359
      %p362 = scmp.ne.s32.totalorder %s345, %s361
      %p363 = scmp.eq.s32.totalorder %s34, 0
      %p364 = por %p362, %p363
      %p365 = scmp.le.s32.totalorder 1, %s28
      %p366 = scmp.lt.s32.totalorder %s28, 5
      %p367 = pnand %p365, %p366
      %p368 = pneg %p367
      // Predicated region
      $region9: #{tpu_custom_call.1} parent=5 // pred_check
        _
      $region10: #{tpu_custom_call.1} parent=5 // pred_check_branch
        %370 = sbr.rel (%p367) target = $region12
      $region11: #{tpu_custom_call.1} parent=5 // pred_region
        %s371 = ssub.s32 %s28, 1
        // Predicated region
        $region13: #{tpu_custom_call.1} parent=11 // pred_check
          %p372 = pneg %p161
        $region14: #{tpu_custom_call.1} parent=11 // pred_check_branch
          %374 = sbr.rel (%p372) target = $region16
        $region15: #{tpu_custom_call.1} parent=11 // pred_region
          %s376 = ssub.s32 2048, 2048
          %377 = vsyncadd [#allocation9], %s376
          %s378 = sshll.u32 [#allocation8], 4
          %s379 = int_to_ptr.vmem [resolvable:$true] %s378
          %384 = dma.hbm_to_vmem [thread:$0]  %s3, 2048, %s379, [#allocation9], 128, 128, 8
        $region16: #{tpu_custom_call.1} parent=11 // pred_fallthru
          _
        // Predicated region
        $region17: #{tpu_custom_call.1} parent=11 // pred_check
          %p385 = pneg %p182
        $region18: #{tpu_custom_call.1} parent=11 // pred_check_branch
          %387 = sbr.rel (%p385) target = $region20
        $region19: #{tpu_custom_call.1} parent=11 // pred_region
          _
        $region20: #{tpu_custom_call.1} parent=11 // pred_fallthru
          _
        // Predicated region
        $region21: #{tpu_custom_call.1} parent=11 // pred_check
          %p388 = pneg %p203
        $region22: #{tpu_custom_call.1} parent=11 // pred_check_branch
          %390 = sbr.rel (%p388) target = $region24
        $region23: #{tpu_custom_call.1} parent=11 // pred_region
          _
        $region24: #{tpu_custom_call.1} parent=11 // pred_fallthru
          _
        // Predicated region
        $region25: #{tpu_custom_call.1} parent=11 // pred_check
          %p391 = pneg %p224
        $region26: #{tpu_custom_call.1} parent=11 // pred_check_branch
          %393 = sbr.rel (%p391) target = $region28
        $region27: #{tpu_custom_call.1} parent=11 // pred_region
          _
        $region28: #{tpu_custom_call.1} parent=11 // pred_fallthru
          _
        // Predicated region
        $region29: #{tpu_custom_call.1} parent=11 // pred_check
          %p394 = pneg %p245
        $region30: #{tpu_custom_call.1} parent=11 // pred_check_branch
          %396 = sbr.rel (%p394) target = $region32
        $region31: #{tpu_custom_call.1} parent=11 // pred_region
          _
        $region32: #{tpu_custom_call.1} parent=11 // pred_fallthru
          _
        // Predicated region
        $region33: #{tpu_custom_call.1} parent=11 // pred_check
          %p397 = pneg %p266
        $region34: #{tpu_custom_call.1} parent=11 // pred_check_branch
          %399 = sbr.rel (%p397) target = $region36
        $region35: #{tpu_custom_call.1} parent=11 // pred_region
          _
        $region36: #{tpu_custom_call.1} parent=11 // pred_fallthru
          _
        // Predicated region
        $region37: #{tpu_custom_call.1} parent=11 // pred_check
          %p400 = pneg %p287
        $region38: #{tpu_custom_call.1} parent=11 // pred_check_branch
          %402 = sbr.rel (%p400) target = $region40
        $region39: #{tpu_custom_call.1} parent=11 // pred_region
          %s404 = ssub.s32 2048, 2048
          %405 = vsyncadd [#allocation9], %s404
          %s406 = sshll.u32 [#allocation10], 4
          %s407 = int_to_ptr.vmem [resolvable:$true] %s406
          %412 = dma.hbm_to_vmem [thread:$0]  %s9, 2048, %s407, [#allocation9], 128, 128, 8
        $region40: #{tpu_custom_call.1} parent=11 // pred_fallthru
          _
        // Predicated region
        $region41: #{tpu_custom_call.1} parent=11 // pred_check
          %p413 = pneg %p308
        $region42: #{tpu_custom_call.1} parent=11 // pred_check_branch
          %415 = sbr.rel (%p413) target = $region44
        $region43: #{tpu_custom_call.1} parent=11 // pred_region
          _
        $region44: #{tpu_custom_call.1} parent=11 // pred_fallthru
          _
        // Predicated region
        $region45: #{tpu_custom_call.1} parent=11 // pred_check
          %p416 = pneg %p329
        $region46: #{tpu_custom_call.1} parent=11 // pred_check_branch
          %418 = sbr.rel (%p416) target = $region48
        $region47: #{tpu_custom_call.1} parent=11 // pred_region
          _
        $region48: #{tpu_custom_call.1} parent=11 // pred_fallthru
          _
      $region12: #{tpu_custom_call.1} parent=5 // pred_fallthru
        _
      %p419 = scmp.lt.s32.totalorder %s28, 4
      // Predicated region
      $region49: #{tpu_custom_call.1} parent=5 // pred_check
        %p420 = pneg %p419
      $region50: #{tpu_custom_call.1} parent=5 // pred_check_branch
        %422 = sbr.rel (%p420) target = $region52
      $region51: #{tpu_custom_call.1} parent=5 // pred_region
        // Predicated region
        $region53: #{tpu_custom_call.1} parent=51 // pred_check
          %p423 = pneg %p70
        $region54: #{tpu_custom_call.1} parent=51 // pred_check_branch
          %425 = sbr.rel (%p423) target = $region56
        $region55: #{tpu_custom_call.1} parent=51 // pred_region
          %s426 = sand.u32 %s60, 1
          %s427 = scalar_lea.sflag [#allocation3], %s426
          %s428 = sand.u32 %s60, 1
          %s429 = smul.addr %s428, 16
          %s430 = scalar_lea.vmem [#allocation2], %s429
          %s431 = smul.u32 %s36, 8
          %s432 = ssub.s32 %s431, 1
          %p433 = scmp.gt.s32.totalorder %s432, 0
          %s434 = scalar_select %p433, %s432, 0
          %s436 = ssub.s32 256, 256
          %437 = vsyncadd %s427, %s436
          %s438 = smul.addr %s434, 2
          %s439 = smul.addr %s35, 32
          %s440 = sadd.s32 %s438, %s439
          %s441 = smul.addr %s440, 128
          %s442 = scalar_lea.hbm %s0, %s441
          %s443 = sshll.u32 %s430, 4
          %s444 = int_to_ptr.vmem [resolvable:$true] %s443
          %449 = dma.hbm_to_vmem [thread:$0]  %s442, 256, %s444, %s427, 128, 128, 8
        $region56: #{tpu_custom_call.1} parent=51 // pred_fallthru
          _
        // Predicated region
        $region57: #{tpu_custom_call.1} parent=51 // pred_check
          %p450 = pneg %p98
        $region58: #{tpu_custom_call.1} parent=51 // pred_check_branch
          %452 = sbr.rel (%p450) target = $region60
        $region59: #{tpu_custom_call.1} parent=51 // pred_region
          %s453 = sand.u32 %s28, 1
          %s454 = scalar_lea.sflag [#allocation6], %s453
          %s455 = sand.u32 %s88, 1
          %s456 = smul.addr %s455, 128
          %s457 = scalar_lea.vmem [#allocation5], %s456
          %s458 = smul.u32 8, %s36
          %s460 = ssub.s32 2048, 2048
          %461 = vsyncadd %s454, %s460
          %s462 = smul.addr %s458, 2
          %s463 = smul.addr %s35, 32
          %s464 = sadd.s32 %s462, %s463
          %s465 = smul.addr %s464, 128
          %s466 = scalar_lea.hbm %s1, %s465
          %s467 = sshll.u32 %s457, 4
          %s468 = int_to_ptr.vmem [resolvable:$true] %s467
          %473 = dma.hbm_to_vmem [thread:$0]  %s466, 2048, %s468, %s454, 128, 128, 8
        $region60: #{tpu_custom_call.1} parent=51 // pred_fallthru
          _
        // Predicated region
        $region61: #{tpu_custom_call.1} parent=51 // pred_check
          %p474 = pneg %p134
        $region62: #{tpu_custom_call.1} parent=51 // pred_check_branch
          %476 = sbr.rel (%p474) target = $region64
        $region63: #{tpu_custom_call.1} parent=51 // pred_region
          %s477 = sand.u32 %s28, 1
          %s478 = scalar_lea.sflag [#allocation6], %s477
          %s479 = sand.u32 %s124, 1
          %s480 = smul.addr %s479, 16
          %s481 = scalar_lea.vmem [#allocation7], %s480
          %s482 = sadd.s32 %s36, 1
          %s483 = smul.u32 %s482, 8
          %p484 = scmp.lt.s32.totalorder %s483, 15
          %s485 = scalar_select %p484, %s483, 15
          %s487 = ssub.s32 256, 256
          %488 = vsyncadd %s478, %s487
          %s489 = smul.addr %s485, 2
          %s490 = smul.addr %s35, 32
          %s491 = sadd.s32 %s489, %s490
          %s492 = smul.addr %s491, 128
          %s493 = scalar_lea.hbm %s2, %s492
          %s494 = sshll.u32 %s481, 4
          %s495 = int_to_ptr.vmem [resolvable:$true] %s494
          %500 = dma.hbm_to_vmem [thread:$0]  %s493, 256, %s495, %s478, 128, 128, 8
        $region64: #{tpu_custom_call.1} parent=51 // pred_fallthru
          _
      $region52: #{tpu_custom_call.1} parent=5 // pred_fallthru
        _
      %p501 = scmp.le.s32.totalorder 1, %s28
      %p502 = scmp.lt.s32.totalorder %s28, 5
      %p503 = pnand %p501, %p502
      %p504 = pneg %p503
      // Predicated region
      $region65: #{tpu_custom_call.1} parent=5 // pred_check
        _
      $region66: #{tpu_custom_call.1} parent=5 // pred_check_branch
        %506 = sbr.rel (%p503) target = $region68
      $region67: #{tpu_custom_call.1} parent=5 // pred_region
        %s507 = ssub.s32 %s28, 1
        %s508 = sand.u32 %s63, 1
        %s509 = scalar_lea.sflag [#allocation3], %s508
        %s510 = sand.u32 %s63, 1
        %s511 = smul.addr %s510, 16
        %s512 = scalar_lea.vmem [#allocation2], %s511
        // Predicated region
        $region69: #{tpu_custom_call.1} parent=67 // pred_check
          %p513 = pneg %p76
        $region70: #{tpu_custom_call.1} parent=67 // pred_check_branch
          %515 = sbr.rel (%p513) target = $region72
        $region71: #{tpu_custom_call.1} parent=67 // pred_region
          %516 = dma.done %s509, 256
        $region72: #{tpu_custom_call.1} parent=67 // pred_fallthru
          _
        %s517 = sand.u32 %s33, 1
        %s518 = scalar_lea.sflag [#allocation6], %s517
        %s519 = sand.u32 %s91, 1
        %s520 = smul.addr %s519, 128
        %s521 = scalar_lea.vmem [#allocation5], %s520
        // Predicated region
        $region73: #{tpu_custom_call.1} parent=67 // pred_check
          %p522 = pneg %p104
        $region74: #{tpu_custom_call.1} parent=67 // pred_check_branch
          %524 = sbr.rel (%p522) target = $region76
        $region75: #{tpu_custom_call.1} parent=67 // pred_region
          %525 = dma.done %s518, 2048
        $region76: #{tpu_custom_call.1} parent=67 // pred_fallthru
          _
        %s526 = sand.u32 %s33, 1
        %s527 = scalar_lea.sflag [#allocation6], %s526
        %s528 = sand.u32 %s127, 1
        %s529 = smul.addr %s528, 16
        %s530 = scalar_lea.vmem [#allocation7], %s529
        // Predicated region
        $region77: #{tpu_custom_call.1} parent=67 // pred_check
          %p531 = pneg %p140
        $region78: #{tpu_custom_call.1} parent=67 // pred_check_branch
          %533 = sbr.rel (%p531) target = $region80
        $region79: #{tpu_custom_call.1} parent=67 // pred_region
          %534 = dma.done %s527, 256
        $region80: #{tpu_custom_call.1} parent=67 // pred_fallthru
          _
        // Predicated region
        $region81: #{tpu_custom_call.1} parent=67 // pred_check
          %p535 = pneg %p161
        $region82: #{tpu_custom_call.1} parent=67 // pred_check_branch
          %537 = sbr.rel (%p535) target = $region84
        $region83: #{tpu_custom_call.1} parent=67 // pred_region
          %538 = dma.done [#allocation9], 2048
        $region84: #{tpu_custom_call.1} parent=67 // pred_fallthru
          _
        // Predicated region
        $region85: #{tpu_custom_call.1} parent=67 // pred_check
          %p539 = pneg %p287
        $region86: #{tpu_custom_call.1} parent=67 // pred_check_branch
          %541 = sbr.rel (%p539) target = $region88
        $region87: #{tpu_custom_call.1} parent=67 // pred_region
          %542 = dma.done [#allocation9], 2048
        $region88: #{tpu_custom_call.1} parent=67 // pred_fallthru
          _
        %s543 = sand.u32 %s63, 1
        %s544 = scalar_lea.sflag [#allocation3], %s543
        %s545 = sand.u32 %s63, 1
        %s546 = smul.addr %s545, 16
        %s547 = scalar_lea.vmem [#allocation2], %s546
        %p548 = pneg %p76
        %p549 = pneg %p73
        %s550 = sand.u32 %s33, 1
        %s551 = scalar_lea.sflag [#allocation6], %s550
        %s552 = sand.u32 %s91, 1
        %s553 = smul.addr %s552, 128
        %s554 = scalar_lea.vmem [#allocation5], %s553
        %p555 = pneg %p104
        %p556 = pneg %p101
        %s557 = sand.u32 %s33, 1
        %s558 = scalar_lea.sflag [#allocation6], %s557
        %s559 = sand.u32 %s127, 1
        %s560 = smul.addr %s559, 16
        %s561 = scalar_lea.vmem [#allocation7], %s560
        %p562 = pneg %p140
        %p563 = pneg %p137
        %p564 = pneg %p161
        %p565 = pneg %p158
        %p566 = pneg %p182
        %p567 = pneg %p179
        %p568 = pneg %p203
        %p569 = pneg %p200
        %p570 = pneg %p224
        %p571 = pneg %p221
        %p572 = pneg %p245
        %p573 = pneg %p242
        %p574 = pneg %p266
        %p575 = pneg %p263
        %p576 = pneg %p287
        %p577 = pneg %p284
        %p578 = pneg %p308
        %p579 = pneg %p305
        %p580 = pneg %p329
        %p581 = pneg %p326
        %p582 = pneg %p357
        %p583 = pneg %p354
        %s584 = sand.u32 %s344, 1
        %s585 = scalar_lea.sflag [#allocation4], %s584
        %s586 = sand.u32 %s344, 1
        %s587 = smul.addr %s586, 128
        %s588 = scalar_lea.vmem [#allocation11], %s587
        %s589 = smul.u32 %s38, 8
        %s590 = ssub.s32 %s589, 1
        %p591 = scmp.gt.s32.totalorder %s590, 0
        %s592 = scalar_select %p591, %s590, 0
        %s593 = smul.u32 8, %s38
        %s594 = sadd.s32 %s38, 1
        %s595 = smul.u32 %s594, 8
        %p596 = scmp.lt.s32.totalorder %s595, 15
        %s597 = scalar_select %p596, %s595, 15
        %s598 = smul.u32 8, %s38
        %p599 = scmp.eq.s32.totalorder %s38, 0
        %p600 = scmp.eq.s32.totalorder %s38, 1
        %v601 = vld [vmem:[%s521] sm:$0xff]
        %v602 = vld [vmem:[%s521 + $0x8] sm:$0xff]
        %v603 = vld [vmem:[%s521 + $0x10] sm:$0xff]
        %v604 = vld [vmem:[%s521 + $0x18] sm:$0xff]
        %v605 = vld [vmem:[%s521 + $0x20] sm:$0xff]
        %v606 = vld [vmem:[%s521 + $0x28] sm:$0xff]
        %v607 = vld [vmem:[%s521 + $0x30] sm:$0xff]
        %v608 = vld [vmem:[%s521 + $0x38] sm:$0xff]
        %v609 = vld [vmem:[%s521 + $0x40] sm:$0xff]
        %v610 = vld [vmem:[%s521 + $0x48] sm:$0xff]
        %v611 = vld [vmem:[%s521 + $0x50] sm:$0xff]
        %v612 = vld [vmem:[%s521 + $0x58] sm:$0xff]
        %v613 = vld [vmem:[%s521 + $0x60] sm:$0xff]
        %v614 = vld [vmem:[%s521 + $0x68] sm:$0xff]
        %v615 = vld [vmem:[%s521 + $0x70] sm:$0xff]
        %v616 = vld [vmem:[%s521 + $0x78] sm:$0xff]
        %v617 = vld [vmem:[%s512] sm:$0xff]
        %v618 = vld [vmem:[%s512 + $0x8] sm:$0xff]
        %v619 = vld [vmem:[%s530] sm:$0xff]
        %v620 = vld [vmem:[%s530 + $0x8] sm:$0xff]
        %v621 = vld [vmem:[#allocation8] sm:$0xff]
        %v622 = vld [vmem:[#allocation8 + $0x8] sm:$0xff]
        %v623 = vld [vmem:[#allocation8 + $0x10] sm:$0xff]
        %v624 = vld [vmem:[#allocation8 + $0x18] sm:$0xff]
        %v625 = vld [vmem:[#allocation8 + $0x20] sm:$0xff]
        %v626 = vld [vmem:[#allocation8 + $0x28] sm:$0xff]
        %v627 = vld [vmem:[#allocation8 + $0x30] sm:$0xff]
        %v628 = vld [vmem:[#allocation8 + $0x38] sm:$0xff]
        %v629 = vld [vmem:[#allocation8 + $0x40] sm:$0xff]
        %v630 = vld [vmem:[#allocation8 + $0x48] sm:$0xff]
        %v631 = vld [vmem:[#allocation8 + $0x50] sm:$0xff]
        %v632 = vld [vmem:[#allocation8 + $0x58] sm:$0xff]
        %v633 = vld [vmem:[#allocation8 + $0x60] sm:$0xff]
        %v634 = vld [vmem:[#allocation8 + $0x68] sm:$0xff]
        %v635 = vld [vmem:[#allocation8 + $0x70] sm:$0xff]
        %v636 = vld [vmem:[#allocation8 + $0x78] sm:$0xff]
        %637 = vmatprep.subr.mxu0 0.0
        %638 = vmatpush1.msra.mxu0 %v621
        %639 = vmatprep.subr.mxu0 0.0
        %640 = vmatpush1.msra.mxu0 %v622
        %641 = vmatprep.subr.mxu0 0.0
        %642 = vmatpush1.msra.mxu0 %v623
        %643 = vmatprep.subr.mxu0 0.0
        %644 = vmatpush1.msra.mxu0 %v624
        %645 = vmatprep.subr.mxu0 0.0
        %646 = vmatpush1.msra.mxu0 %v625
        %647 = vmatprep.subr.mxu0 0.0
        %648 = vmatpush1.msra.mxu0 %v626
        %649 = vmatprep.subr.mxu0 0.0
        %650 = vmatpush1.msra.mxu0 %v627
        %651 = vmatprep.subr.mxu0 0.0
        %652 = vmatpush1.msra.mxu0 %v628
        %653 = vmatprep.subr.mxu0 0.0
        %654 = vmatpush1.msra.mxu0 %v629
        %655 = vmatprep.subr.mxu0 0.0
        %656 = vmatpush1.msra.mxu0 %v630
        %657 = vmatprep.subr.mxu0 0.0
        %658 = vmatpush1.msra.mxu0 %v631
        %659 = vmatprep.subr.mxu0 0.0
        %660 = vmatpush1.msra.mxu0 %v632
        %661 = vmatprep.subr.mxu0 0.0
        %662 = vmatpush1.msra.mxu0 %v633
        %663 = vmatprep.subr.mxu0 0.0
        %664 = vmatpush1.msra.mxu0 %v634
        %665 = vmatprep.subr.mxu0 0.0
        %666 = vmatpush1.msra.mxu0 %v635
        %667 = vmatprep.subr.mxu0 0.0
        %668 = vmatpush1.msra.mxu0 %v636
        %669 = vmatprep.subr.mxu0 0.0
        %670 = vmatpush1.msra.mxu0 0.0
        %671 = vmatprep.subr.mxu0 0.0
        %672 = vmatpush1.msra.mxu0 0.0
        %673 = vmatprep.subr.mxu0 0.0
        %674 = vmatpush1.msra.mxu0 0.0
        %675 = vmatprep.subr.mxu0 0.0
        %676 = vmatpush1.msra.mxu0 0.0
        %677 = vmatprep.subr.mxu0 0.0
        %678 = vmatpush1.msra.mxu0 0.0
        %679 = vmatprep.subr.mxu0 0.0
        %680 = vmatpush1.msra.mxu0 0.0
        %681 = vmatprep.subr.mxu0 0.0
        %682 = vmatpush1.msra.mxu0 0.0
        %683 = vmatprep.subr.mxu0 0.0
        %684 = vmatpush1.msra.mxu0 0.0
        %685 = vmatprep.subr.mxu0 0.0
        %686 = vmatpush1.msra.mxu0 0.0
        %687 = vmatprep.subr.mxu0 0.0
        %688 = vmatpush1.msra.mxu0 0.0
        %689 = vmatprep.subr.mxu0 0.0
        %690 = vmatpush1.msra.mxu0 0.0
        %691 = vmatprep.subr.mxu0 0.0
        %692 = vmatpush1.msra.mxu0 0.0
        %693 = vmatprep.subr.mxu0 0.0
        %694 = vmatpush1.msra.mxu0 0.0
        %695 = vmatprep.subr.mxu0 0.0
        %696 = vmatpush1.msra.mxu0 0.0
        %697 = vmatprep.subr.mxu0 0.0
        %698 = vmatpush1.msra.mxu0 0.0
        %699 = vmatprep.subr.mxu0 0.0
        %700 = vmatpush1.msra.mxu0 0.0
        %701 = vmatprep.mubr.f32.mxu0 0.0
        %702 = vmatmul.mubr.f32.gmra.mrb[0].mxu0 %v617
        %v703 = vpop.f32.mrb[0].mxu0
        %v704 = vadd.f32 0.0, %v703
        %v705 = vpop.f32.mrb[0].mxu0
        %706 = vmatprep.mubr.f32.mxu0 0.0
        %707 = vmatmul.mubr.f32.gmra.mrb[0].mxu0 %v618
        %v708 = vpop.f32.mrb[0].mxu0
        %v709 = vadd.f32 0.0, %v708
        %v710 = vpop.f32.mrb[0].mxu0
        %711 = vmatprep.mubr.f32.mxu0 0.0
        %712 = vmatmul.mubr.f32.gmra.mrb[0].mxu0 %v601
        %v713 = vpop.f32.mrb[0].mxu0
        %v714 = vadd.f32 0.0, %v713
        %v715 = vpop.f32.mrb[0].mxu0
        %716 = vmatprep.mubr.f32.mxu0 0.0
        %717 = vmatmul.mubr.f32.gmra.mrb[0].mxu0 %v602
        %v718 = vpop.f32.mrb[0].mxu0
        %v719 = vadd.f32 0.0, %v718
        %v720 = vpop.f32.mrb[0].mxu0
        %721 = vmatprep.mubr.f32.mxu0 0.0
        %722 = vmatmul.mubr.f32.gmra.mrb[0].mxu0 %v603
        %v723 = vpop.f32.mrb[0].mxu0
        %v724 = vadd.f32 0.0, %v723
        %v725 = vpop.f32.mrb[0].mxu0
        %726 = vmatprep.mubr.f32.mxu0 0.0
        %727 = vmatmul.mubr.f32.gmra.mrb[0].mxu0 %v604
        %v728 = vpop.f32.mrb[0].mxu0
        %v729 = vadd.f32 0.0, %v728
        %v730 = vpop.f32.mrb[0].mxu0
        %731 = vmatprep.mubr.f32.mxu0 0.0
        %732 = vmatmul.mubr.f32.gmra.mrb[0].mxu0 %v605
        %v733 = vpop.f32.mrb[0].mxu0
        %v734 = vadd.f32 0.0, %v733
        %v735 = vpop.f32.mrb[0].mxu0
        %736 = vmatprep.mubr.f32.mxu0 0.0
        %737 = vmatmul.mubr.f32.gmra.mrb[0].mxu0 %v606
        %v738 = vpop.f32.mrb[0].mxu0
        %v739 = vadd.f32 0.0, %v738
        %v740 = vpop.f32.mrb[0].mxu0
        %741 = vmatprep.mubr.f32.mxu0 0.0
        %742 = vmatmul.mubr.f32.gmra.mrb[0].mxu0 %v607
        %v743 = vpop.f32.mrb[0].mxu0
        %v744 = vadd.f32 0.0, %v743
        %v745 = vpop.f32.mrb[0].mxu0
        %746 = vmatprep.mubr.f32.mxu0 0.0
        %747 = vmatmul.mubr.f32.gmra.mrb[0].mxu0 %v608
        %v748 = vpop.f32.mrb[0].mxu0
        %v749 = vadd.f32 0.0, %v748
        %v750 = vpop.f32.mrb[0].mxu0
        %751 = vmatprep.mubr.f32.mxu0 0.0
        %752 = vmatmul.mubr.f32.gmra.mrb[0].mxu0 %v609
        %v753 = vpop.f32.mrb[0].mxu0
        %v754 = vadd.f32 0.0, %v753
        %v755 = vpop.f32.mrb[0].mxu0
        %756 = vmatprep.mubr.f32.mxu0 0.0
        %757 = vmatmul.mubr.f32.gmra.mrb[0].mxu0 %v610
        %v758 = vpop.f32.mrb[0].mxu0
        %v759 = vadd.f32 0.0, %v758
        %v760 = vpop.f32.mrb[0].mxu0
        %761 = vmatprep.mubr.f32.mxu0 0.0
        %762 = vmatmul.mubr.f32.gmra.mrb[0].mxu0 %v611
        %v763 = vpop.f32.mrb[0].mxu0
        %v764 = vadd.f32 0.0, %v763
        %v765 = vpop.f32.mrb[0].mxu0
        %766 = vmatprep.mubr.f32.mxu0 0.0
        %767 = vmatmul.mubr.f32.gmra.mrb[0].mxu0 %v612
        %v768 = vpop.f32.mrb[0].mxu0
        %v769 = vadd.f32 0.0, %v768
        %v770 = vpop.f32.mrb[0].mxu0
        %771 = vmatprep.mubr.f32.mxu0 0.0
        %772 = vmatmul.mubr.f32.gmra.mrb[0].mxu0 %v613
        %v773 = vpop.f32.mrb[0].mxu0
        %v774 = vadd.f32 0.0, %v773
        %v775 = vpop.f32.mrb[0].mxu0
        %776 = vmatprep.mubr.f32.mxu0 0.0
        %777 = vmatmul.mubr.f32.gmra.mrb[0].mxu0 %v614
        %v778 = vpop.f32.mrb[0].mxu0
        %v779 = vadd.f32 0.0, %v778
        %v780 = vpop.f32.mrb[0].mxu0
        %781 = vmatprep.mubr.f32.mxu0 0.0
        %782 = vmatmul.mubr.f32.gmra.mrb[0].mxu0 %v615
        %v783 = vpop.f32.mrb[0].mxu0
        %v784 = vadd.f32 0.0, %v783
        %v785 = vpop.f32.mrb[0].mxu0
        %786 = vmatprep.mubr.f32.mxu0 0.0
        %787 = vmatmul.mubr.f32.gmra.mrb[0].mxu0 %v616
        %v788 = vpop.f32.mrb[0].mxu0
        %v789 = vadd.f32 0.0, %v788
        %v790 = vpop.f32.mrb[0].mxu0
        %791 = vmatprep.mubr.f32.mxu0 0.0
        %792 = vmatmul.mubr.f32.gmra.mrb[0].mxu0 %v619
        %v793 = vpop.f32.mrb[0].mxu0
        %v794 = vadd.f32 0.0, %v793
        %v795 = vpop.f32.mrb[0].mxu0
        %796 = vmatprep.mubr.f32.mxu0 0.0
        %797 = vmatmul.mubr.f32.gmra.mrb[0].mxu0 %v620
        %v798 = vpop.f32.mrb[0].mxu0
        %v799 = vadd.f32 0.0, %v798
        %v800 = vpop.f32.mrb[0].mxu0
        %801 = vdwg.mxu0
        %v802 = vld [vmem:[%s4] sm:$0x1]
        %v804 = vlaneseq
        %v805 = vshrl.u32 %v804, 7
        %v806 = vsub.s32 0, %v805
        %v807 = vrot.slane %v802, %v806
        %v809 = vmul.f32 %v704, %v807
        %v810 = vmul.f32 %v709, %v807
        %v811 = vmul.f32 %v714, %v807
        %v812 = vmul.f32 %v719, %v807
        %v813 = vmul.f32 %v724, %v807
        %v814 = vmul.f32 %v729, %v807
        %v815 = vmul.f32 %v734, %v807
        %v816 = vmul.f32 %v739, %v807
        %v817 = vmul.f32 %v744, %v807
        %v818 = vmul.f32 %v749, %v807
        %v819 = vmul.f32 %v754, %v807
        %v820 = vmul.f32 %v759, %v807
        %v821 = vmul.f32 %v764, %v807
        %v822 = vmul.f32 %v769, %v807
        %v823 = vmul.f32 %v774, %v807
        %v824 = vmul.f32 %v779, %v807
        %v825 = vmul.f32 %v784, %v807
        %v826 = vmul.f32 %v789, %v807
        %v827 = vmul.f32 %v794, %v807
        %v828 = vmul.f32 %v799, %v807
        %v829 = vld [vmem:[%s5] sm:$0x1]
        %v831 = vlaneseq
        %v832 = vshrl.u32 %v831, 7
        %v833 = vsub.s32 0, %v832
        %v834 = vrot.slane %v829, %v833
        %v836 = vadd.f32 %v809, %v834
        %v837 = vadd.f32 %v810, %v834
        %v838 = vadd.f32 %v811, %v834
        %v839 = vadd.f32 %v812, %v834
        %v840 = vadd.f32 %v813, %v834
        %v841 = vadd.f32 %v814, %v834
        %v842 = vadd.f32 %v815, %v834
        %v843 = vadd.f32 %v816, %v834
        %v844 = vadd.f32 %v817, %v834
        %v845 = vadd.f32 %v818, %v834
        %v846 = vadd.f32 %v819, %v834
        %v847 = vadd.f32 %v820, %v834
        %v848 = vadd.f32 %v821, %v834
        %v849 = vadd.f32 %v822, %v834
        %v850 = vadd.f32 %v823, %v834
        %v851 = vadd.f32 %v824, %v834
        %v852 = vadd.f32 %v825, %v834
        %v853 = vadd.f32 %v826, %v834
        %v854 = vadd.f32 %v827, %v834
        %v855 = vadd.f32 %v828, %v834
        %v856 = vmax.f32 %v836, 0.0
        %v857 = vmax.f32 %v837, 0.0
        %v858 = vmax.f32 %v838, 0.0
        %v859 = vmax.f32 %v839, 0.0
        %v860 = vmax.f32 %v840, 0.0
        %v861 = vmax.f32 %v841, 0.0
        %v862 = vmax.f32 %v842, 0.0
        %v863 = vmax.f32 %v843, 0.0
        %v864 = vmax.f32 %v844, 0.0
        %v865 = vmax.f32 %v845, 0.0
        %v866 = vmax.f32 %v846, 0.0
        %v867 = vmax.f32 %v847, 0.0
        %v868 = vmax.f32 %v848, 0.0
        %v869 = vmax.f32 %v849, 0.0
        %v870 = vmax.f32 %v850, 0.0
        %v871 = vmax.f32 %v851, 0.0
        %v872 = vmax.f32 %v852, 0.0
        %v873 = vmax.f32 %v853, 0.0
        %v874 = vmax.f32 %v854, 0.0
        %v875 = vmax.f32 %v855, 0.0
        %v876 = vmin.f32 %v856, 6.0
        %v877 = vmin.f32 %v857, 6.0
        %v878 = vmin.f32 %v858, 6.0
        %v879 = vmin.f32 %v859, 6.0
        %v880 = vmin.f32 %v860, 6.0
        %v881 = vmin.f32 %v861, 6.0
        %v882 = vmin.f32 %v862, 6.0
        %v883 = vmin.f32 %v863, 6.0
        %v884 = vmin.f32 %v864, 6.0
        %v885 = vmin.f32 %v865, 6.0
        %v886 = vmin.f32 %v866, 6.0
        %v887 = vmin.f32 %v867, 6.0
        %v888 = vmin.f32 %v868, 6.0
        %v889 = vmin.f32 %v869, 6.0
        %v890 = vmin.f32 %v870, 6.0
        %v891 = vmin.f32 %v871, 6.0
        %v892 = vmin.f32 %v872, 6.0
        %v893 = vmin.f32 %v873, 6.0
        %v894 = vmin.f32 %v874, 6.0
        %v895 = vmin.f32 %v875, 6.0
        %s896 = scalar_select %p599, 1, 0
        %v897 = vstv %s896
        %vm898 = vcmp.eq.s32.totalorder %v897, 1
        %v899 = vsel %vm898, 0.0, %v876
        %v900 = vsel %vm898, 0.0, %v877
        %s901 = scalar_select %p600, 1, 0
        %v902 = vstv %s901
        %vm903 = vcmp.eq.s32.totalorder %v902, 1
        %v904 = vsel %vm903, 0.0, %v894
        %v905 = vsel %vm903, 0.0, %v895
        %vm926 = vcmask 1040384
        %v927 = vrot.slane %v899, 7
        %v928 = vrot.slane %v900, 7
        %v929 = vsel %vm926, %v927, %v928
        %v930 = vrot.slane %v878, 7
        %v931 = vrot.slane %v879, 7
        %v932 = vsel %vm926, %v930, %v931
        %v933 = vrot.slane %v880, 7
        %v934 = vrot.slane %v881, 7
        %v935 = vsel %vm926, %v933, %v934
        %v936 = vrot.slane %v882, 7
        %v937 = vrot.slane %v883, 7
        %v938 = vsel %vm926, %v936, %v937
        %v939 = vrot.slane %v884, 7
        %v940 = vrot.slane %v885, 7
        %v941 = vsel %vm926, %v939, %v940
        %v942 = vrot.slane %v886, 7
        %v943 = vrot.slane %v887, 7
        %v944 = vsel %vm926, %v942, %v943
        %v945 = vrot.slane %v888, 7
        %v946 = vrot.slane %v889, 7
        %v947 = vsel %vm926, %v945, %v946
        %v948 = vrot.slane %v890, 7
        %v949 = vrot.slane %v891, 7
        %v950 = vsel %vm926, %v948, %v949
        %v951 = vrot.slane %v892, 7
        %v952 = vrot.slane %v893, 7
        %v953 = vsel %vm926, %v951, %v952
        %v954 = vrot.slane %v904, 7
        %v955 = vrot.slane %v905, 7
        %v956 = vsel %vm926, %v954, %v955
        %v977 = vsel %vm926, 0.0, %v927
        %v978 = vsel %vm926, 0.0, %v930
        %v979 = vsel %vm926, 0.0, %v933
        %v980 = vsel %vm926, 0.0, %v936
        %v981 = vsel %vm926, 0.0, %v939
        %v982 = vsel %vm926, 0.0, %v942
        %v983 = vsel %vm926, 0.0, %v945
        %v984 = vsel %vm926, 0.0, %v948
        %v985 = vsel %vm926, 0.0, %v951
        %v986 = vsel %vm926, 0.0, %v954
        %vm987 = vcmask 1046528
        %v988 = vrot.slane %v899, 1
        %v989 = vrot.slane %v900, 1
        %v990 = vsel %vm987, %v988, %v989
        %v991 = vrot.slane %v878, 1
        %v992 = vrot.slane %v879, 1
        %v993 = vsel %vm987, %v991, %v992
        %v994 = vrot.slane %v880, 1
        %v995 = vrot.slane %v881, 1
        %v996 = vsel %vm987, %v994, %v995
        %v997 = vrot.slane %v882, 1
        %v998 = vrot.slane %v883, 1
        %v999 = vsel %vm987, %v997, %v998
        %v1000 = vrot.slane %v884, 1
        %v1001 = vrot.slane %v885, 1
        %v1002 = vsel %vm987, %v1000, %v1001
        %v1003 = vrot.slane %v886, 1
        %v1004 = vrot.slane %v887, 1
        %v1005 = vsel %vm987, %v1003, %v1004
        %v1006 = vrot.slane %v888, 1
        %v1007 = vrot.slane %v889, 1
        %v1008 = vsel %vm987, %v1006, %v1007
        %v1009 = vrot.slane %v890, 1
        %v1010 = vrot.slane %v891, 1
        %v1011 = vsel %vm987, %v1009, %v1010
        %v1012 = vrot.slane %v892, 1
        %v1013 = vrot.slane %v893, 1
        %v1014 = vsel %vm987, %v1012, %v1013
        %v1015 = vrot.slane %v904, 1
        %v1016 = vrot.slane %v905, 1
        %v1017 = vsel %vm987, %v1015, %v1016
        %v1038 = vsel %vm987, %v989, 0.0
        %v1039 = vsel %vm987, %v992, 0.0
        %v1040 = vsel %vm987, %v995, 0.0
        %v1041 = vsel %vm987, %v998, 0.0
        %v1042 = vsel %vm987, %v1001, 0.0
        %v1043 = vsel %vm987, %v1004, 0.0
        %v1044 = vsel %vm987, %v1007, 0.0
        %v1045 = vsel %vm987, %v1010, 0.0
        %v1046 = vsel %vm987, %v1013, 0.0
        %v1047 = vsel %vm987, %v1016, 0.0
        %v1048 = vld [vmem:[%s6] sm:$0x7]
        %v1049 = vld [vmem:[%s6 + $0x4] sm:$0x7]
        %v1050 = vld [vmem:[%s6 + $0x8] sm:$0x7]
        %v1051 = vlaneseq
        %v1052 = vshrl.u32 %v1051, 7
        %v1053 = vsub.s32 0, %v1052
        %v1054 = vrot.slane %v1048, %v1053
        %v1055 = vmul.f32 %v977, %v1054
        %v1056 = vmul.f32 %v929, %v1054
        %v1057 = vmul.f32 %v978, %v1054
        %v1058 = vmul.f32 %v932, %v1054
        %v1059 = vmul.f32 %v979, %v1054
        %v1060 = vmul.f32 %v935, %v1054
        %v1061 = vmul.f32 %v980, %v1054
        %v1062 = vmul.f32 %v938, %v1054
        %v1063 = vmul.f32 %v981, %v1054
        %v1064 = vmul.f32 %v941, %v1054
        %v1065 = vmul.f32 %v982, %v1054
        %v1066 = vmul.f32 %v944, %v1054
        %v1067 = vmul.f32 %v983, %v1054
        %v1068 = vmul.f32 %v947, %v1054
        %v1069 = vmul.f32 %v984, %v1054
        %v1070 = vmul.f32 %v950, %v1054
        %v1071 = vadd.f32 %v1055, 0.0
        %v1072 = vadd.f32 %v1056, 0.0
        %v1073 = vadd.f32 %v1057, 0.0
        %v1074 = vadd.f32 %v1058, 0.0
        %v1075 = vadd.f32 %v1059, 0.0
        %v1076 = vadd.f32 %v1060, 0.0
        %v1077 = vadd.f32 %v1061, 0.0
        %v1078 = vadd.f32 %v1062, 0.0
        %v1079 = vadd.f32 %v1063, 0.0
        %v1080 = vadd.f32 %v1064, 0.0
        %v1081 = vadd.f32 %v1065, 0.0
        %v1082 = vadd.f32 %v1066, 0.0
        %v1083 = vadd.f32 %v1067, 0.0
        %v1084 = vadd.f32 %v1068, 0.0
        %v1085 = vadd.f32 %v1069, 0.0
        %v1086 = vadd.f32 %v1070, 0.0
        %v1087 = vlaneseq
        %v1088 = vshrl.u32 %v1087, 7
        %v1089 = vsub.s32 1, %v1088
        %v1090 = vrot.slane %v1048, %v1089
        %v1091 = vmul.f32 %v899, %v1090
        %v1092 = vmul.f32 %v900, %v1090
        %v1093 = vmul.f32 %v878, %v1090
        %v1094 = vmul.f32 %v879, %v1090
        %v1095 = vmul.f32 %v880, %v1090
        %v1096 = vmul.f32 %v881, %v1090
        %v1097 = vmul.f32 %v882, %v1090
        %v1098 = vmul.f32 %v883, %v1090
        %v1099 = vmul.f32 %v884, %v1090
        %v1100 = vmul.f32 %v885, %v1090
        %v1101 = vmul.f32 %v886, %v1090
        %v1102 = vmul.f32 %v887, %v1090
        %v1103 = vmul.f32 %v888, %v1090
        %v1104 = vmul.f32 %v889, %v1090
        %v1105 = vmul.f32 %v890, %v1090
        %v1106 = vmul.f32 %v891, %v1090
        %v1107 = vadd.f32 %v1071, %v1091
        %v1108 = vadd.f32 %v1072, %v1092
        %v1109 = vadd.f32 %v1073, %v1093
        %v1110 = vadd.f32 %v1074, %v1094
        %v1111 = vadd.f32 %v1075, %v1095
        %v1112 = vadd.f32 %v1076, %v1096
        %v1113 = vadd.f32 %v1077, %v1097
        %v1114 = vadd.f32 %v1078, %v1098
        %v1115 = vadd.f32 %v1079, %v1099
        %v1116 = vadd.f32 %v1080, %v1100
        %v1117 = vadd.f32 %v1081, %v1101
        %v1118 = vadd.f32 %v1082, %v1102
        %v1119 = vadd.f32 %v1083, %v1103
        %v1120 = vadd.f32 %v1084, %v1104
        %v1121 = vadd.f32 %v1085, %v1105
        %v1122 = vadd.f32 %v1086, %v1106
        %v1123 = vlaneseq
        %v1124 = vshrl.u32 %v1123, 7
        %v1125 = vsub.s32 2, %v1124
        %v1126 = vrot.slane %v1048, %v1125
        %v1127 = vmul.f32 %v990, %v1126
        %v1128 = vmul.f32 %v1038, %v1126
        %v1129 = vmul.f32 %v993, %v1126
        %v1130 = vmul.f32 %v1039, %v1126
        %v1131 = vmul.f32 %v996, %v1126
        %v1132 = vmul.f32 %v1040, %v1126
        %v1133 = vmul.f32 %v999, %v1126
        %v1134 = vmul.f32 %v1041, %v1126
        %v1135 = vmul.f32 %v1002, %v1126
        %v1136 = vmul.f32 %v1042, %v1126
        %v1137 = vmul.f32 %v1005, %v1126
        %v1138 = vmul.f32 %v1043, %v1126
        %v1139 = vmul.f32 %v1008, %v1126
        %v1140 = vmul.f32 %v1044, %v1126
        %v1141 = vmul.f32 %v1011, %v1126
        %v1142 = vmul.f32 %v1045, %v1126
        %v1143 = vadd.f32 %v1107, %v1127
        %v1144 = vadd.f32 %v1108, %v1128
        %v1145 = vadd.f32 %v1109, %v1129
        %v1146 = vadd.f32 %v1110, %v1130
        %v1147 = vadd.f32 %v1111, %v1131
        %v1148 = vadd.f32 %v1112, %v1132
        %v1149 = vadd.f32 %v1113, %v1133
        %v1150 = vadd.f32 %v1114, %v1134
        %v1151 = vadd.f32 %v1115, %v1135
        %v1152 = vadd.f32 %v1116, %v1136
        %v1153 = vadd.f32 %v1117, %v1137
        %v1154 = vadd.f32 %v1118, %v1138
        %v1155 = vadd.f32 %v1119, %v1139
        %v1156 = vadd.f32 %v1120, %v1140
        %v1157 = vadd.f32 %v1121, %v1141
        %v1158 = vadd.f32 %v1122, %v1142
        %v1159 = vlaneseq
        %v1160 = vshrl.u32 %v1159, 7
        %v1161 = vsub.s32 0, %v1160
        %v1162 = vrot.slane %v1049, %v1161
        %v1163 = vmul.f32 %v978, %v1162
        %v1164 = vmul.f32 %v932, %v1162
        %v1165 = vmul.f32 %v979, %v1162
        %v1166 = vmul.f32 %v935, %v1162
        %v1167 = vmul.f32 %v980, %v1162
        %v1168 = vmul.f32 %v938, %v1162
        %v1169 = vmul.f32 %v981, %v1162
        %v1170 = vmul.f32 %v941, %v1162
        %v1171 = vmul.f32 %v982, %v1162
        %v1172 = vmul.f32 %v944, %v1162
        %v1173 = vmul.f32 %v983, %v1162
        %v1174 = vmul.f32 %v947, %v1162
        %v1175 = vmul.f32 %v984, %v1162
        %v1176 = vmul.f32 %v950, %v1162
        %v1177 = vmul.f32 %v985, %v1162
        %v1178 = vmul.f32 %v953, %v1162
        %v1179 = vadd.f32 %v1143, %v1163
        %v1180 = vadd.f32 %v1144, %v1164
        %v1181 = vadd.f32 %v1145, %v1165
        %v1182 = vadd.f32 %v1146, %v1166
        %v1183 = vadd.f32 %v1147, %v1167
        %v1184 = vadd.f32 %v1148, %v1168
        %v1185 = vadd.f32 %v1149, %v1169
        %v1186 = vadd.f32 %v1150, %v1170
        %v1187 = vadd.f32 %v1151, %v1171
        %v1188 = vadd.f32 %v1152, %v1172
        %v1189 = vadd.f32 %v1153, %v1173
        %v1190 = vadd.f32 %v1154, %v1174
        %v1191 = vadd.f32 %v1155, %v1175
        %v1192 = vadd.f32 %v1156, %v1176
        %v1193 = vadd.f32 %v1157, %v1177
        %v1194 = vadd.f32 %v1158, %v1178
        %v1195 = vlaneseq
        %v1196 = vshrl.u32 %v1195, 7
        %v1197 = vsub.s32 1, %v1196
        %v1198 = vrot.slane %v1049, %v1197
        %v1199 = vmul.f32 %v878, %v1198
        %v1200 = vmul.f32 %v879, %v1198
        %v1201 = vmul.f32 %v880, %v1198
        %v1202 = vmul.f32 %v881, %v1198
        %v1203 = vmul.f32 %v882, %v1198
        %v1204 = vmul.f32 %v883, %v1198
        %v1205 = vmul.f32 %v884, %v1198
        %v1206 = vmul.f32 %v885, %v1198
        %v1207 = vmul.f32 %v886, %v1198
        %v1208 = vmul.f32 %v887, %v1198
        %v1209 = vmul.f32 %v888, %v1198
        %v1210 = vmul.f32 %v889, %v1198
        %v1211 = vmul.f32 %v890, %v1198
        %v1212 = vmul.f32 %v891, %v1198
        %v1213 = vmul.f32 %v892, %v1198
        %v1214 = vmul.f32 %v893, %v1198
        %v1215 = vadd.f32 %v1179, %v1199
        %v1216 = vadd.f32 %v1180, %v1200
        %v1217 = vadd.f32 %v1181, %v1201
        %v1218 = vadd.f32 %v1182, %v1202
        %v1219 = vadd.f32 %v1183, %v1203
        %v1220 = vadd.f32 %v1184, %v1204
        %v1221 = vadd.f32 %v1185, %v1205
        %v1222 = vadd.f32 %v1186, %v1206
        %v1223 = vadd.f32 %v1187, %v1207
        %v1224 = vadd.f32 %v1188, %v1208
        %v1225 = vadd.f32 %v1189, %v1209
        %v1226 = vadd.f32 %v1190, %v1210
        %v1227 = vadd.f32 %v1191, %v1211
        %v1228 = vadd.f32 %v1192, %v1212
        %v1229 = vadd.f32 %v1193, %v1213
        %v1230 = vadd.f32 %v1194, %v1214
        %v1231 = vlaneseq
        %v1232 = vshrl.u32 %v1231, 7
        %v1233 = vsub.s32 2, %v1232
        %v1234 = vrot.slane %v1049, %v1233
        %v1235 = vmul.f32 %v993, %v1234
        %v1236 = vmul.f32 %v1039, %v1234
        %v1237 = vmul.f32 %v996, %v1234
        %v1238 = vmul.f32 %v1040, %v1234
        %v1239 = vmul.f32 %v999, %v1234
        %v1240 = vmul.f32 %v1041, %v1234
        %v1241 = vmul.f32 %v1002, %v1234
        %v1242 = vmul.f32 %v1042, %v1234
        %v1243 = vmul.f32 %v1005, %v1234
        %v1244 = vmul.f32 %v1043, %v1234
        %v1245 = vmul.f32 %v1008, %v1234
        %v1246 = vmul.f32 %v1044, %v1234
        %v1247 = vmul.f32 %v1011, %v1234
        %v1248 = vmul.f32 %v1045, %v1234
        %v1249 = vmul.f32 %v1014, %v1234
        %v1250 = vmul.f32 %v1046, %v1234
        %v1251 = vadd.f32 %v1215, %v1235
        %v1252 = vadd.f32 %v1216, %v1236
        %v1253 = vadd.f32 %v1217, %v1237
        %v1254 = vadd.f32 %v1218, %v1238
        %v1255 = vadd.f32 %v1219, %v1239
        %v1256 = vadd.f32 %v1220, %v1240
        %v1257 = vadd.f32 %v1221, %v1241
        %v1258 = vadd.f32 %v1222, %v1242
        %v1259 = vadd.f32 %v1223, %v1243
        %v1260 = vadd.f32 %v1224, %v1244
        %v1261 = vadd.f32 %v1225, %v1245
        %v1262 = vadd.f32 %v1226, %v1246
        %v1263 = vadd.f32 %v1227, %v1247
        %v1264 = vadd.f32 %v1228, %v1248
        %v1265 = vadd.f32 %v1229, %v1249
        %v1266 = vadd.f32 %v1230, %v1250
        %v1267 = vlaneseq
        %v1268 = vshrl.u32 %v1267, 7
        %v1269 = vsub.s32 0, %v1268
        %v1270 = vrot.slane %v1050, %v1269
        %v1271 = vmul.f32 %v979, %v1270
        %v1272 = vmul.f32 %v935, %v1270
        %v1273 = vmul.f32 %v980, %v1270
        %v1274 = vmul.f32 %v938, %v1270
        %v1275 = vmul.f32 %v981, %v1270
        %v1276 = vmul.f32 %v941, %v1270
        %v1277 = vmul.f32 %v982, %v1270
        %v1278 = vmul.f32 %v944, %v1270
        %v1279 = vmul.f32 %v983, %v1270
        %v1280 = vmul.f32 %v947, %v1270
        %v1281 = vmul.f32 %v984, %v1270
        %v1282 = vmul.f32 %v950, %v1270
        %v1283 = vmul.f32 %v985, %v1270
        %v1284 = vmul.f32 %v953, %v1270
        %v1285 = vmul.f32 %v986, %v1270
        %v1286 = vmul.f32 %v956, %v1270
        %v1287 = vadd.f32 %v1251, %v1271
        %v1288 = vadd.f32 %v1252, %v1272
        %v1289 = vadd.f32 %v1253, %v1273
        %v1290 = vadd.f32 %v1254, %v1274
        %v1291 = vadd.f32 %v1255, %v1275
        %v1292 = vadd.f32 %v1256, %v1276
        %v1293 = vadd.f32 %v1257, %v1277
        %v1294 = vadd.f32 %v1258, %v1278
        %v1295 = vadd.f32 %v1259, %v1279
        %v1296 = vadd.f32 %v1260, %v1280
        %v1297 = vadd.f32 %v1261, %v1281
        %v1298 = vadd.f32 %v1262, %v1282
        %v1299 = vadd.f32 %v1263, %v1283
        %v1300 = vadd.f32 %v1264, %v1284
        %v1301 = vadd.f32 %v1265, %v1285
        %v1302 = vadd.f32 %v1266, %v1286
        %v1303 = vlaneseq
        %v1304 = vshrl.u32 %v1303, 7
        %v1305 = vsub.s32 1, %v1304
        %v1306 = vrot.slane %v1050, %v1305
        %v1307 = vmul.f32 %v880, %v1306
        %v1308 = vmul.f32 %v881, %v1306
        %v1309 = vmul.f32 %v882, %v1306
        %v1310 = vmul.f32 %v883, %v1306
        %v1311 = vmul.f32 %v884, %v1306
        %v1312 = vmul.f32 %v885, %v1306
        %v1313 = vmul.f32 %v886, %v1306
        %v1314 = vmul.f32 %v887, %v1306
        %v1315 = vmul.f32 %v888, %v1306
        %v1316 = vmul.f32 %v889, %v1306
        %v1317 = vmul.f32 %v890, %v1306
        %v1318 = vmul.f32 %v891, %v1306
        %v1319 = vmul.f32 %v892, %v1306
        %v1320 = vmul.f32 %v893, %v1306
        %v1321 = vmul.f32 %v904, %v1306
        %v1322 = vmul.f32 %v905, %v1306
        %v1323 = vadd.f32 %v1287, %v1307
        %v1324 = vadd.f32 %v1288, %v1308
        %v1325 = vadd.f32 %v1289, %v1309
        %v1326 = vadd.f32 %v1290, %v1310
        %v1327 = vadd.f32 %v1291, %v1311
        %v1328 = vadd.f32 %v1292, %v1312
        %v1329 = vadd.f32 %v1293, %v1313
        %v1330 = vadd.f32 %v1294, %v1314
        %v1331 = vadd.f32 %v1295, %v1315
        %v1332 = vadd.f32 %v1296, %v1316
        %v1333 = vadd.f32 %v1297, %v1317
        %v1334 = vadd.f32 %v1298, %v1318
        %v1335 = vadd.f32 %v1299, %v1319
        %v1336 = vadd.f32 %v1300, %v1320
        %v1337 = vadd.f32 %v1301, %v1321
        %v1338 = vadd.f32 %v1302, %v1322
        %v1339 = vlaneseq
        %v1340 = vshrl.u32 %v1339, 7
        %v1341 = vsub.s32 2, %v1340
        %v1342 = vrot.slane %v1050, %v1341
        %v1343 = vmul.f32 %v996, %v1342
        %v1344 = vmul.f32 %v1040, %v1342
        %v1345 = vmul.f32 %v999, %v1342
        %v1346 = vmul.f32 %v1041, %v1342
        %v1347 = vmul.f32 %v1002, %v1342
        %v1348 = vmul.f32 %v1042, %v1342
        %v1349 = vmul.f32 %v1005, %v1342
        %v1350 = vmul.f32 %v1043, %v1342
        %v1351 = vmul.f32 %v1008, %v1342
        %v1352 = vmul.f32 %v1044, %v1342
        %v1353 = vmul.f32 %v1011, %v1342
        %v1354 = vmul.f32 %v1045, %v1342
        %v1355 = vmul.f32 %v1014, %v1342
        %v1356 = vmul.f32 %v1046, %v1342
        %v1357 = vmul.f32 %v1017, %v1342
        %v1358 = vmul.f32 %v1047, %v1342
        %v1359 = vadd.f32 %v1323, %v1343
        %v1360 = vadd.f32 %v1324, %v1344
        %v1361 = vadd.f32 %v1325, %v1345
        %v1362 = vadd.f32 %v1326, %v1346
        %v1363 = vadd.f32 %v1327, %v1347
        %v1364 = vadd.f32 %v1328, %v1348
        %v1365 = vadd.f32 %v1329, %v1349
        %v1366 = vadd.f32 %v1330, %v1350
        %v1367 = vadd.f32 %v1331, %v1351
        %v1368 = vadd.f32 %v1332, %v1352
        %v1369 = vadd.f32 %v1333, %v1353
        %v1370 = vadd.f32 %v1334, %v1354
        %v1371 = vadd.f32 %v1335, %v1355
        %v1372 = vadd.f32 %v1336, %v1356
        %v1373 = vadd.f32 %v1337, %v1357
        %v1374 = vadd.f32 %v1338, %v1358
        %v1375 = vld [vmem:[%s7] sm:$0x1]
        %v1376 = vld [vmem:[%s8] sm:$0x1]
        %v1378 = vlaneseq
        %v1379 = vshrl.u32 %v1378, 7
        %v1380 = vsub.s32 0, %v1379
        %v1381 = vrot.slane %v1375, %v1380
        %v1383 = vmul.f32 %v1359, %v1381
        %v1384 = vmul.f32 %v1360, %v1381
        %v1385 = vmul.f32 %v1361, %v1381
        %v1386 = vmul.f32 %v1362, %v1381
        %v1387 = vmul.f32 %v1363, %v1381
        %v1388 = vmul.f32 %v1364, %v1381
        %v1389 = vmul.f32 %v1365, %v1381
        %v1390 = vmul.f32 %v1366, %v1381
        %v1391 = vmul.f32 %v1367, %v1381
        %v1392 = vmul.f32 %v1368, %v1381
        %v1393 = vmul.f32 %v1369, %v1381
        %v1394 = vmul.f32 %v1370, %v1381
        %v1395 = vmul.f32 %v1371, %v1381
        %v1396 = vmul.f32 %v1372, %v1381
        %v1397 = vmul.f32 %v1373, %v1381
        %v1398 = vmul.f32 %v1374, %v1381
        %v1400 = vlaneseq
        %v1401 = vshrl.u32 %v1400, 7
        %v1402 = vsub.s32 0, %v1401
        %v1403 = vrot.slane %v1376, %v1402
        %v1405 = vadd.f32 %v1383, %v1403
        %v1406 = vadd.f32 %v1384, %v1403
        %v1407 = vadd.f32 %v1385, %v1403
        %v1408 = vadd.f32 %v1386, %v1403
        %v1409 = vadd.f32 %v1387, %v1403
        %v1410 = vadd.f32 %v1388, %v1403
        %v1411 = vadd.f32 %v1389, %v1403
        %v1412 = vadd.f32 %v1390, %v1403
        %v1413 = vadd.f32 %v1391, %v1403
        %v1414 = vadd.f32 %v1392, %v1403
        %v1415 = vadd.f32 %v1393, %v1403
        %v1416 = vadd.f32 %v1394, %v1403
        %v1417 = vadd.f32 %v1395, %v1403
        %v1418 = vadd.f32 %v1396, %v1403
        %v1419 = vadd.f32 %v1397, %v1403
        %v1420 = vadd.f32 %v1398, %v1403
        %v1421 = vmax.f32 %v1405, 0.0
        %v1422 = vmax.f32 %v1406, 0.0
        %v1423 = vmax.f32 %v1407, 0.0
        %v1424 = vmax.f32 %v1408, 0.0
        %v1425 = vmax.f32 %v1409, 0.0
        %v1426 = vmax.f32 %v1410, 0.0
        %v1427 = vmax.f32 %v1411, 0.0
        %v1428 = vmax.f32 %v1412, 0.0
        %v1429 = vmax.f32 %v1413, 0.0
        %v1430 = vmax.f32 %v1414, 0.0
        %v1431 = vmax.f32 %v1415, 0.0
        %v1432 = vmax.f32 %v1416, 0.0
        %v1433 = vmax.f32 %v1417, 0.0
        %v1434 = vmax.f32 %v1418, 0.0
        %v1435 = vmax.f32 %v1419, 0.0
        %v1436 = vmax.f32 %v1420, 0.0
        %v1437 = vmin.f32 %v1421, 6.0
        %v1438 = vmin.f32 %v1422, 6.0
        %v1439 = vmin.f32 %v1423, 6.0
        %v1440 = vmin.f32 %v1424, 6.0
        %v1441 = vmin.f32 %v1425, 6.0
        %v1442 = vmin.f32 %v1426, 6.0
        %v1443 = vmin.f32 %v1427, 6.0
        %v1444 = vmin.f32 %v1428, 6.0
        %v1445 = vmin.f32 %v1429, 6.0
        %v1446 = vmin.f32 %v1430, 6.0
        %v1447 = vmin.f32 %v1431, 6.0
        %v1448 = vmin.f32 %v1432, 6.0
        %v1449 = vmin.f32 %v1433, 6.0
        %v1450 = vmin.f32 %v1434, 6.0
        %v1451 = vmin.f32 %v1435, 6.0
        %v1452 = vmin.f32 %v1436, 6.0
        %v1453 = vld [vmem:[#allocation10] sm:$0xff]
        %v1454 = vld [vmem:[#allocation10 + $0x8] sm:$0xff]
        %v1455 = vld [vmem:[#allocation10 + $0x10] sm:$0xff]
        %v1456 = vld [vmem:[#allocation10 + $0x18] sm:$0xff]
        %v1457 = vld [vmem:[#allocation10 + $0x20] sm:$0xff]
        %v1458 = vld [vmem:[#allocation10 + $0x28] sm:$0xff]
        %v1459 = vld [vmem:[#allocation10 + $0x30] sm:$0xff]
        %v1460 = vld [vmem:[#allocation10 + $0x38] sm:$0xff]
        %v1461 = vld [vmem:[#allocation10 + $0x40] sm:$0xff]
        %v1462 = vld [vmem:[#allocation10 + $0x48] sm:$0xff]
        %v1463 = vld [vmem:[#allocation10 + $0x50] sm:$0xff]
        %v1464 = vld [vmem:[#allocation10 + $0x58] sm:$0xff]
        %v1465 = vld [vmem:[#allocation10 + $0x60] sm:$0xff]
        %v1466 = vld [vmem:[#allocation10 + $0x68] sm:$0xff]
        %v1467 = vld [vmem:[#allocation10 + $0x70] sm:$0xff]
        %v1468 = vld [vmem:[#allocation10 + $0x78] sm:$0xff]
        %1469 = vmatprep.subr.mxu0 0.0
        %1470 = vmatpush1.msra.mxu0 %v1453
        %1471 = vmatprep.subr.mxu0 0.0
        %1472 = vmatpush1.msra.mxu0 %v1454
        %1473 = vmatprep.subr.mxu0 0.0
        %1474 = vmatpush1.msra.mxu0 %v1455
        %1475 = vmatprep.subr.mxu0 0.0
        %1476 = vmatpush1.msra.mxu0 %v1456
        %1477 = vmatprep.subr.mxu0 0.0
        %1478 = vmatpush1.msra.mxu0 %v1457
        %1479 = vmatprep.subr.mxu0 0.0
        %1480 = vmatpush1.msra.mxu0 %v1458
        %1481 = vmatprep.subr.mxu0 0.0
        %1482 = vmatpush1.msra.mxu0 %v1459
        %1483 = vmatprep.subr.mxu0 0.0
        %1484 = vmatpush1.msra.mxu0 %v1460
        %1485 = vmatprep.subr.mxu0 0.0
        %1486 = vmatpush1.msra.mxu0 %v1461
        %1487 = vmatprep.subr.mxu0 0.0
        %1488 = vmatpush1.msra.mxu0 %v1462
        %1489 = vmatprep.subr.mxu0 0.0
        %1490 = vmatpush1.msra.mxu0 %v1463
        %1491 = vmatprep.subr.mxu0 0.0
        %1492 = vmatpush1.msra.mxu0 %v1464
        %1493 = vmatprep.subr.mxu0 0.0
        %1494 = vmatpush1.msra.mxu0 %v1465
        %1495 = vmatprep.subr.mxu0 0.0
        %1496 = vmatpush1.msra.mxu0 %v1466
        %1497 = vmatprep.subr.mxu0 0.0
        %1498 = vmatpush1.msra.mxu0 %v1467
        %1499 = vmatprep.subr.mxu0 0.0
        %1500 = vmatpush1.msra.mxu0 %v1468
        %1501 = vmatprep.subr.mxu0 0.0
        %1502 = vmatpush1.msra.mxu0 0.0
        %1503 = vmatprep.subr.mxu0 0.0
        %1504 = vmatpush1.msra.mxu0 0.0
        %1505 = vmatprep.subr.mxu0 0.0
        %1506 = vmatpush1.msra.mxu0 0.0
        %1507 = vmatprep.subr.mxu0 0.0
        %1508 = vmatpush1.msra.mxu0 0.0
        %1509 = vmatprep.subr.mxu0 0.0
        %1510 = vmatpush1.msra.mxu0 0.0
        %1511 = vmatprep.subr.mxu0 0.0
        %1512 = vmatpush1.msra.mxu0 0.0
        %1513 = vmatprep.subr.mxu0 0.0
        %1514 = vmatpush1.msra.mxu0 0.0
        %1515 = vmatprep.subr.mxu0 0.0
        %1516 = vmatpush1.msra.mxu0 0.0
        %1517 = vmatprep.subr.mxu0 0.0
        %1518 = vmatpush1.msra.mxu0 0.0
        %1519 = vmatprep.subr.mxu0 0.0
        %1520 = vmatpush1.msra.mxu0 0.0
        %1521 = vmatprep.subr.mxu0 0.0
        %1522 = vmatpush1.msra.mxu0 0.0
        %1523 = vmatprep.subr.mxu0 0.0
        %1524 = vmatpush1.msra.mxu0 0.0
        %1525 = vmatprep.subr.mxu0 0.0
        %1526 = vmatpush1.msra.mxu0 0.0
        %1527 = vmatprep.subr.mxu0 0.0
        %1528 = vmatpush1.msra.mxu0 0.0
        %1529 = vmatprep.subr.mxu0 0.0
        %1530 = vmatpush1.msra.mxu0 0.0
        %1531 = vmatprep.subr.mxu0 0.0
        %1532 = vmatpush1.msra.mxu0 0.0
        %1533 = vmatprep.mubr.f32.mxu0 0.0
        %1534 = vmatmul.mubr.f32.gmra.mrb[0].mxu0 %v1437
        %v1535 = vpop.f32.mrb[0].mxu0
        %v1536 = vadd.f32 0.0, %v1535
        %v1537 = vpop.f32.mrb[0].mxu0
        %1538 = vmatprep.mubr.f32.mxu0 0.0
        %1539 = vmatmul.mubr.f32.gmra.mrb[0].mxu0 %v1438
        %v1540 = vpop.f32.mrb[0].mxu0
        %v1541 = vadd.f32 0.0, %v1540
        %v1542 = vpop.f32.mrb[0].mxu0
        %1543 = vmatprep.mubr.f32.mxu0 0.0
        %1544 = vmatmul.mubr.f32.gmra.mrb[0].mxu0 %v1439
        %v1545 = vpop.f32.mrb[0].mxu0
        %v1546 = vadd.f32 0.0, %v1545
        %v1547 = vpop.f32.mrb[0].mxu0
        %1548 = vmatprep.mubr.f32.mxu0 0.0
        %1549 = vmatmul.mubr.f32.gmra.mrb[0].mxu0 %v1440
        %v1550 = vpop.f32.mrb[0].mxu0
        %v1551 = vadd.f32 0.0, %v1550
        %v1552 = vpop.f32.mrb[0].mxu0
        %1553 = vmatprep.mubr.f32.mxu0 0.0
        %1554 = vmatmul.mubr.f32.gmra.mrb[0].mxu0 %v1441
        %v1555 = vpop.f32.mrb[0].mxu0
        %v1556 = vadd.f32 0.0, %v1555
        %v1557 = vpop.f32.mrb[0].mxu0
        %1558 = vmatprep.mubr.f32.mxu0 0.0
        %1559 = vmatmul.mubr.f32.gmra.mrb[0].mxu0 %v1442
        %v1560 = vpop.f32.mrb[0].mxu0
        %v1561 = vadd.f32 0.0, %v1560
        %v1562 = vpop.f32.mrb[0].mxu0
        %1563 = vmatprep.mubr.f32.mxu0 0.0
        %1564 = vmatmul.mubr.f32.gmra.mrb[0].mxu0 %v1443
        %v1565 = vpop.f32.mrb[0].mxu0
        %v1566 = vadd.f32 0.0, %v1565
        %v1567 = vpop.f32.mrb[0].mxu0
        %1568 = vmatprep.mubr.f32.mxu0 0.0
        %1569 = vmatmul.mubr.f32.gmra.mrb[0].mxu0 %v1444
        %v1570 = vpop.f32.mrb[0].mxu0
        %v1571 = vadd.f32 0.0, %v1570
        %v1572 = vpop.f32.mrb[0].mxu0
        %1573 = vmatprep.mubr.f32.mxu0 0.0
        %1574 = vmatmul.mubr.f32.gmra.mrb[0].mxu0 %v1445
        %v1575 = vpop.f32.mrb[0].mxu0
        %v1576 = vadd.f32 0.0, %v1575
        %v1577 = vpop.f32.mrb[0].mxu0
        %1578 = vmatprep.mubr.f32.mxu0 0.0
        %1579 = vmatmul.mubr.f32.gmra.mrb[0].mxu0 %v1446
        %v1580 = vpop.f32.mrb[0].mxu0
        %v1581 = vadd.f32 0.0, %v1580
        %v1582 = vpop.f32.mrb[0].mxu0
        %1583 = vmatprep.mubr.f32.mxu0 0.0
        %1584 = vmatmul.mubr.f32.gmra.mrb[0].mxu0 %v1447
        %v1585 = vpop.f32.mrb[0].mxu0
        %v1586 = vadd.f32 0.0, %v1585
        %v1587 = vpop.f32.mrb[0].mxu0
        %1588 = vmatprep.mubr.f32.mxu0 0.0
        %1589 = vmatmul.mubr.f32.gmra.mrb[0].mxu0 %v1448
        %v1590 = vpop.f32.mrb[0].mxu0
        %v1591 = vadd.f32 0.0, %v1590
        %v1592 = vpop.f32.mrb[0].mxu0
        %1593 = vmatprep.mubr.f32.mxu0 0.0
        %1594 = vmatmul.mubr.f32.gmra.mrb[0].mxu0 %v1449
        %v1595 = vpop.f32.mrb[0].mxu0
        %v1596 = vadd.f32 0.0, %v1595
        %v1597 = vpop.f32.mrb[0].mxu0
        %1598 = vmatprep.mubr.f32.mxu0 0.0
        %1599 = vmatmul.mubr.f32.gmra.mrb[0].mxu0 %v1450
        %v1600 = vpop.f32.mrb[0].mxu0
        %v1601 = vadd.f32 0.0, %v1600
        %v1602 = vpop.f32.mrb[0].mxu0
        %1603 = vmatprep.mubr.f32.mxu0 0.0
        %1604 = vmatmul.mubr.f32.gmra.mrb[0].mxu0 %v1451
        %v1605 = vpop.f32.mrb[0].mxu0
        %v1606 = vadd.f32 0.0, %v1605
        %v1607 = vpop.f32.mrb[0].mxu0
        %1608 = vmatprep.mubr.f32.mxu0 0.0
        %1609 = vmatmul.mubr.f32.gmra.mrb[0].mxu0 %v1452
        %v1610 = vpop.f32.mrb[0].mxu0
        %v1611 = vadd.f32 0.0, %v1610
        %v1612 = vpop.f32.mrb[0].mxu0
        %1613 = vdwg.mxu0
        %v1614 = vld [vmem:[%s10] sm:$0x1]
        %v1616 = vlaneseq
        %v1617 = vshrl.u32 %v1616, 7
        %v1618 = vsub.s32 0, %v1617
        %v1619 = vrot.slane %v1614, %v1618
        %v1621 = vmul.f32 %v1536, %v1619
        %v1622 = vmul.f32 %v1541, %v1619
        %v1623 = vmul.f32 %v1546, %v1619
        %v1624 = vmul.f32 %v1551, %v1619
        %v1625 = vmul.f32 %v1556, %v1619
        %v1626 = vmul.f32 %v1561, %v1619
        %v1627 = vmul.f32 %v1566, %v1619
        %v1628 = vmul.f32 %v1571, %v1619
        %v1629 = vmul.f32 %v1576, %v1619
        %v1630 = vmul.f32 %v1581, %v1619
        %v1631 = vmul.f32 %v1586, %v1619
        %v1632 = vmul.f32 %v1591, %v1619
        %v1633 = vmul.f32 %v1596, %v1619
        %v1634 = vmul.f32 %v1601, %v1619
        %v1635 = vmul.f32 %v1606, %v1619
        %v1636 = vmul.f32 %v1611, %v1619
        %v1637 = vld [vmem:[%s11] sm:$0x1]
        %v1639 = vlaneseq
        %v1640 = vshrl.u32 %v1639, 7
        %v1641 = vsub.s32 0, %v1640
        %v1642 = vrot.slane %v1637, %v1641
        %v1644 = vadd.f32 %v1621, %v1642
        %v1645 = vadd.f32 %v1622, %v1642
        %v1646 = vadd.f32 %v1623, %v1642
        %v1647 = vadd.f32 %v1624, %v1642
        %v1648 = vadd.f32 %v1625, %v1642
        %v1649 = vadd.f32 %v1626, %v1642
        %v1650 = vadd.f32 %v1627, %v1642
        %v1651 = vadd.f32 %v1628, %v1642
        %v1652 = vadd.f32 %v1629, %v1642
        %v1653 = vadd.f32 %v1630, %v1642
        %v1654 = vadd.f32 %v1631, %v1642
        %v1655 = vadd.f32 %v1632, %v1642
        %v1656 = vadd.f32 %v1633, %v1642
        %v1657 = vadd.f32 %v1634, %v1642
        %v1658 = vadd.f32 %v1635, %v1642
        %v1659 = vadd.f32 %v1636, %v1642
        %v1660 = vadd.f32 %v1644, %v601
        %v1661 = vadd.f32 %v1645, %v602
        %v1662 = vadd.f32 %v1646, %v603
        %v1663 = vadd.f32 %v1647, %v604
        %v1664 = vadd.f32 %v1648, %v605
        %v1665 = vadd.f32 %v1649, %v606
        %v1666 = vadd.f32 %v1650, %v607
        %v1667 = vadd.f32 %v1651, %v608
        %v1668 = vadd.f32 %v1652, %v609
        %v1669 = vadd.f32 %v1653, %v610
        %v1670 = vadd.f32 %v1654, %v611
        %v1671 = vadd.f32 %v1655, %v612
        %v1672 = vadd.f32 %v1656, %v613
        %v1673 = vadd.f32 %v1657, %v614
        %v1674 = vadd.f32 %v1658, %v615
        %v1675 = vadd.f32 %v1659, %v616
        %1676 = vst [vmem:[%s588] sm:$0xff] %v1660
        %1677 = vst [vmem:[%s588 + $0x8] sm:$0xff] %v1661
        %1678 = vst [vmem:[%s588 + $0x10] sm:$0xff] %v1662
        %1679 = vst [vmem:[%s588 + $0x18] sm:$0xff] %v1663
        %1680 = vst [vmem:[%s588 + $0x20] sm:$0xff] %v1664
        %1681 = vst [vmem:[%s588 + $0x28] sm:$0xff] %v1665
        %1682 = vst [vmem:[%s588 + $0x30] sm:$0xff] %v1666
        %1683 = vst [vmem:[%s588 + $0x38] sm:$0xff] %v1667
        %1684 = vst [vmem:[%s588 + $0x40] sm:$0xff] %v1668
        %1685 = vst [vmem:[%s588 + $0x48] sm:$0xff] %v1669
        %1686 = vst [vmem:[%s588 + $0x50] sm:$0xff] %v1670
        %1687 = vst [vmem:[%s588 + $0x58] sm:$0xff] %v1671
        %1688 = vst [vmem:[%s588 + $0x60] sm:$0xff] %v1672
        %1689 = vst [vmem:[%s588 + $0x68] sm:$0xff] %v1673
        %1690 = vst [vmem:[%s588 + $0x70] sm:$0xff] %v1674
        %1691 = vst [vmem:[%s588 + $0x78] sm:$0xff] %v1675
        %s1692 = sand.u32 %s344, 1
        %s1693 = scalar_lea.sflag [#allocation4], %s1692
        %s1694 = sand.u32 %s344, 1
        %s1695 = smul.addr %s1694, 128
        %s1696 = scalar_lea.vmem [#allocation11], %s1695
        // Predicated region
        $region89: #{tpu_custom_call.1} parent=67 // pred_check
          %p1697 = pneg %p354
        $region90: #{tpu_custom_call.1} parent=67 // pred_check_branch
          %1699 = sbr.rel (%p1697) target = $region92
        $region91: #{tpu_custom_call.1} parent=67 // pred_region
          %s1700 = smul.u32 8, %s38
          %s1702 = ssub.s32 2048, 2048
          %1703 = vsyncadd %s1693, %s1702
          %s1704 = smul.addr %s1700, 2
          %s1705 = smul.addr %s37, 32
          %s1706 = sadd.s32 %s1704, %s1705
          %s1707 = smul.addr %s1706, 128
          %s1708 = scalar_lea.hbm %s12, %s1707
          %s1709 = sshll.u32 %s1696, 4
          %s1710 = int_to_ptr.vmem [resolvable:$true] %s1709
          %1715 = dma.vmem_to_hbm [thread:$0]  %s1710, 2048, %s1708, %s1693, 128, 128, 8
        $region92: #{tpu_custom_call.1} parent=67 // pred_fallthru
          _
      $region68: #{tpu_custom_call.1} parent=5 // pred_fallthru
        _
      %p1716 = scmp.le.s32.totalorder 2, %s28
      // Predicated region
      $region93: #{tpu_custom_call.1} parent=5 // pred_check
        %p1717 = pneg %p1716
      $region94: #{tpu_custom_call.1} parent=5 // pred_check_branch
        %1719 = sbr.rel (%p1717) target = $region96
      $region95: #{tpu_custom_call.1} parent=5 // pred_region
        %s1720 = ssub.s32 %s28, 2
        // Predicated region
        $region97: #{tpu_custom_call.1} parent=95 // pred_check
          %p1721 = pneg %p360
        $region98: #{tpu_custom_call.1} parent=95 // pred_check_branch
          %1723 = sbr.rel (%p1721) target = $region100
        $region99: #{tpu_custom_call.1} parent=95 // pred_region
          %s1724 = sand.u32 %s345, 1
          %s1725 = scalar_lea.sflag [#allocation4], %s1724
          %s1726 = sand.u32 %s345, 1
          %s1727 = smul.addr %s1726, 128
          %s1728 = scalar_lea.vmem [#allocation11], %s1727
          %1729 = dma.done %s1725, 2048
        $region100: #{tpu_custom_call.1} parent=95 // pred_fallthru
          _
      $region96: #{tpu_custom_call.1} parent=5 // pred_fallthru
        _
    $region6: #{tpu_custom_call.1} parent=1 // loop_footer
      %s32 = sadd.s32 1, %s28
    $region7: #{tpu_custom_call.1} parent=1 // loop_footer_branch
      %27 = sbr.rel target = $region3
    $region8: #{tpu_custom_call.1} parent=1 // loop_exit
      _
    %1730 = vsyncpa [#allocation3], 1
    %s1731 = scalar_lea.sflag [#allocation3], 1
    %1732 = vsyncpa %s1731, 1
    %1733 = vsyncpa [#allocation6], 1
    %s1734 = scalar_lea.sflag [#allocation6], 1
    %1735 = vsyncpa %s1734, 1
    %1736 = vsyncpa [#allocation9], 1
    %1737 = vsyncpa [#allocation4], 1
    %s1738 = scalar_lea.sflag [#allocation4], 1
    %1739 = vsyncpa %s1738, 1

</llo_original>
